<compile_context>
chip_gen: v7x
topology: tpu7x:2x2x1
jax: 0.10.0
libtpu: 0.0.40
codegen_flags: <defaults>
</compile_context>

<pallas_src>
import functools
import math

import jax
import jax.numpy as jnp
from jax.experimental import pallas as pl
from jax.experimental.pallas import tpu as pltpu


def _round_up(a, b):
    return (a + b - 1) // b * b


def _tpu_vmem_capacity_bytes():
    try:
        return int(pltpu.get_tpu_info().vmem_capacity_bytes)
    except Exception:
        return 128 * 1024 * 1024


def _layer_norm(x, gamma, beta, eps):
    mean = jnp.mean(x, axis=-1, keepdims=True)
    c = x - mean
    var = jnp.mean(c * c, axis=-1, keepdims=True)
    return c * jax.lax.rsqrt(var + eps) * gamma + beta


def _encoder_layer_kernel(xq_ref, xkv_ref, wq_ref, wk_ref, wv_ref, wo_ref,
                          g1_ref, be1_ref, w1_ref, b1_ref, w2_ref, b2_ref,
                          g2_ref, be2_ref, out_ref, attn_ref,
                          kh_scr, vh_scr, *, n_head, d_k, d_v, eps):
    f32 = jnp.float32
    bf16 = jnp.bfloat16

    # ---- K/V projection: once per batch (q-tile axis is the innermost,
    # "arbitrary" grid axis), cached head-major in bf16 VMEM scratch.
    @pl.when(pl.program_id(1) == 0)
    def _project_kv():
        x_kv = xkv_ref[0]                                              # (Lk, d_model) bf16
        lk = x_kv.shape[0]
        kp = jnp.dot(x_kv, wk_ref[...], preferred_element_type=f32)    # (Lk, H*d_k)
        vp = jnp.dot(x_kv, wv_ref[...], preferred_element_type=f32)    # (Lk, H*d_v)
        kh_scr[...] = jnp.transpose(kp.reshape(lk, n_head, d_k), (1, 0, 2)).astype(bf16)
        vh_scr[...] = jnp.transpose(vp.reshape(lk, n_head, d_v), (1, 0, 2)).astype(bf16)

    x_q = xq_ref[0]                                                    # (tq, d_model) f32 (residual)
    tq = x_q.shape[0]

    # ---- Q projection (1/temperature folded into Wq in the wrapper), head-major.
    qp = jnp.dot(x_q.astype(bf16), wq_ref[...], preferred_element_type=f32)
    qh = jnp.transpose(qp.reshape(tq, n_head, d_k), (1, 0, 2)).astype(bf16)  # (H, tq, d_k)

    # ---- scaled dot-product attention, batched over heads.
    scores = jnp.einsum('hqd,hkd->hqk', qh, kh_scr[...],
                        preferred_element_type=f32)                    # (H, tq, Lk) f32
    m = jnp.max(scores, axis=-1, keepdims=True)
    e = jnp.exp(scores - m)
    p = e * pl.reciprocal(jnp.sum(e, axis=-1, keepdims=True), approx=True)
    p_bf = p.astype(bf16)
    attn_ref[0] = p_bf                                                 # bf16 writeback, all heads

    o = jnp.einsum('hqk,hkd->hqd', p_bf, vh_scr[...],
                   preferred_element_type=f32)                         # (H, tq, d_v) f32

    # ---- merge heads + output projection as sum_h (o_h @ Wo_h): head-batched
    # matmul + cheap reduction over H -- no transpose/reshape relayout.
    proj = jnp.sum(jnp.einsum('hqd,hdm->hqm', o.astype(bf16), wo_ref[...],
                              preferred_element_type=f32), axis=0)     # (tq, d_model)
    attn_out = _layer_norm(proj + x_q, g1_ref[...], be1_ref[...], eps)

    # ---- position-wise feed-forward + residual + LayerNorm.
    h = jnp.dot(attn_out.astype(bf16), w1_ref[...], preferred_element_type=f32) + b1_ref[...]
    h = jnp.maximum(h, 0.0)
    y = jnp.dot(h.astype(bf16), w2_ref[...], preferred_element_type=f32) + b2_ref[...]
    out_ref[0] = _layer_norm(y + attn_out, g2_ref[...], be2_ref[...], eps)


def encoder_layer(x, params, *, n_head, d_k, d_v, block_q=None):
    """EncoderLayer forward (mask=None). Returns (enc_output f32, enc_slf_attn bf16)."""
    B, L, d_model = x.shape
    wq, wk, wv, wo, g1, be1, w1, b1, w2, b2, g2, be2 = params
    d_inner = w1.shape[1]

    # Generation-aware budgets: v7x has 64 MiB VMEM per TC, v5e/v6e have 128 MiB.
    vmem_cap = _tpu_vmem_capacity_bytes()
    small_vmem = vmem_cap <= 64 * 1024 * 1024
    if block_q is None:
        block_q = 128 if small_vmem else 256
    block_q = max(8, _round_up(block_q, 8))
    vmem_limit = min(vmem_cap, (40 if small_vmem else 64) * 1024 * 1024)

    # Fold 1/sqrt(d_k) into Wq; cast all matmul weights to bf16 (half DMA, full MXU rate).
    inv_temp = 1.0 / (d_k ** 0.5)
    wq_b = (wq * inv_temp).astype(jnp.bfloat16)                  # (d_model, H*d_k)
    wk_b = wk.astype(jnp.bfloat16)                               # (d_model, H*d_k)
    wv_b = wv.astype(jnp.bfloat16)                               # (d_model, H*d_v)
    wo_b = wo.astype(jnp.bfloat16).reshape(n_head, d_v, d_model)  # head-major fc weight
    w1_b = w1.astype(jnp.bfloat16)
    w2_b = w2.astype(jnp.bfloat16)

    g1r, be1r = g1.reshape(1, d_model), be1.reshape(1, d_model)
    g2r, be2r = g2.reshape(1, d_model), be2.reshape(1, d_model)
    b1r, b2r = b1.reshape(1, d_inner), b2.reshape(1, d_model)

    # Query tiling: pad query rows only (keys stay unpadded -> no key masking).
    tq = min(block_q, _round_up(L, 8))
    L_pad = _round_up(L, tq)
    n_qt = L_pad // tq
    x_q = x if L_pad == L else jnp.pad(x, ((0, 0), (0, L_pad - L), (0, 0)))
    x_kv = x.astype(jnp.bfloat16)                                # bf16 K/V stream

    kernel = functools.partial(_encoder_layer_kernel, n_head=n_head, d_k=d_k,
                               d_v=d_v, eps=1e-6)

    out_shapes = (
        jax.ShapeDtypeStruct((B, L_pad, d_model), jnp.float32),
        jax.ShapeDtypeStruct((B, n_head, L_pad, L), jnp.bfloat16),
    )

    grid_spec = pltpu.PrefetchScalarGridSpec(
        num_scalar_prefetch=0,
        grid=(B, n_qt),
        in_specs=[
            pl.BlockSpec((1, tq, d_model), lambda b, i: (b, i, 0)),      # query rows (f32)
            pl.BlockSpec((1, L, d_model), lambda b, i: (b, 0, 0)),       # key/value rows (bf16)
            pl.BlockSpec((d_model, n_head * d_k), lambda b, i: (0, 0)),  # Wq^T (scaled, bf16)
            pl.BlockSpec((d_model, n_head * d_k), lambda b, i: (0, 0)),  # Wk^T
            pl.BlockSpec((d_model, n_head * d_v), lambda b, i: (0, 0)),  # Wv^T
            pl.BlockSpec((n_head, d_v, d_model), lambda b, i: (0, 0, 0)),  # fc^T, head-major
            pl.BlockSpec((1, d_model), lambda b, i: (0, 0)),             # LN1 gamma
            pl.BlockSpec((1, d_model), lambda b, i: (0, 0)),             # LN1 beta
            pl.BlockSpec((d_model, d_inner), lambda b, i: (0, 0)),       # W1^T
            pl.BlockSpec((1, d_inner), lambda b, i: (0, 0)),             # b1
            pl.BlockSpec((d_inner, d_model), lambda b, i: (0, 0)),       # W2^T
            pl.BlockSpec((1, d_model), lambda b, i: (0, 0)),             # b2
            pl.BlockSpec((1, d_model), lambda b, i: (0, 0)),             # LN2 gamma
            pl.BlockSpec((1, d_model), lambda b, i: (0, 0)),             # LN2 beta
        ],
        out_specs=[
            pl.BlockSpec((1, tq, d_model), lambda b, i: (b, i, 0)),
            pl.BlockSpec((1, n_head, tq, L), lambda b, i: (b, 0, i, 0)),
        ],
        scratch_shapes=[
            pltpu.VMEM((n_head, L, d_k), jnp.bfloat16),   # cached K, head-major
            pltpu.VMEM((n_head, L, d_v), jnp.bfloat16),   # cached V, head-major
        ],
    )

    flops = 2 * B * (
        L_pad * d_model * n_head * d_k              # Q projection
        + L * d_model * n_head * (d_k + d_v)        # K + V projections (once per batch)
        + n_head * L_pad * L * (d_k + d_v)          # QK^T + PV
        + L_pad * n_head * d_v * d_model            # output projection
        + 2 * L_pad * d_model * d_inner             # FFN
    )
    weight_bytes = 2 * int(wq.size + wk.size + wv.size + wo.size + w1.size + w2.size)
    bytes_accessed = (int(x.size) * 4 + int(x.size) * 2 + weight_bytes
                      + B * L_pad * d_model * 4
                      + B * n_head * L_pad * L * 2)
    cost = pl.CostEstimate(flops=int(flops),
                           transcendentals=int(B * n_head * L_pad * L),
                           bytes_accessed=int(bytes_accessed))

    out, attn = pl.pallas_call(
        kernel,
        out_shape=out_shapes,
        grid_spec=grid_spec,
        compiler_params=pltpu.CompilerParams(
            dimension_semantics=("parallel", "arbitrary"),
            vmem_limit_bytes=int(vmem_limit)),
        cost_estimate=cost,
    )(x_q, x_kv, wq_b, wk_b, wv_b, wo_b, g1r, be1r, w1_b, b1r, w2_b, b2r, g2r, be2r)

    if L_pad != L:
        out = out[:, :L, :]
        attn = attn[:, :, :L, :]
    return out, attn


# ----------------------------------------------------------------------------
# Plain-JAX f32 reference mirroring the PyTorch EncoderLayer (mask=None).
# ----------------------------------------------------------------------------
def _ln_ref(x, g, b, eps=1e-6):
    mean = jnp.mean(x, axis=-1, keepdims=True)
    var = jnp.mean((x - mean) ** 2, axis=-1, keepdims=True)
    return (x - mean) / jnp.sqrt(var + eps) * g + b


def reference_encoder_layer(x, params, *, n_head, d_k, d_v):
    wq, wk, wv, wo, g1, be1, w1, b1, w2, b2, g2, be2 = params
    B, L, d_model = x.shape
    residual = x
    qp = (x @ wq).reshape(B, L, n_head, d_k).transpose(0, 2, 1, 3)
    kp = (x @ wk).reshape(B, L, n_head, d_k).transpose(0, 2, 1, 3)
    vp = (x @ wv).reshape(B, L, n_head, d_v).transpose(0, 2, 1, 3)
    scores = jnp.einsum('bhqd,bhkd->bhqk', qp / (d_k ** 0.5), kp)
    attn = jax.nn.softmax(scores, axis=-1)
    o = jnp.einsum('bhqk,bhkd->bhqd', attn, vp)
    o = o.transpose(0, 2, 1, 3).reshape(B, L, n_head * d_v)
    o = _ln_ref(o @ wo + residual, g1, be1)
    h = jax.nn.relu(o @ w1 + b1)
    y = _ln_ref(h @ w2 + b2 + o, g2, be2)
    return y, attn


if __name__ == "__main__":
    # Small shapes consistent with the module's forward.
    B, L, d_model, d_inner = 2, 8, 32, 64
    n_head, d_k, d_v = 4, 8, 8

    key = jax.random.PRNGKey(0)
    kx, kwq, kwk, kwv, kwo, kw1, kb1, kw2, kb2 = jax.random.split(key, 9)

    x = jax.random.normal(kx, (B, L, d_model), dtype=jnp.float32)

    # Deterministic parameter init (shapes from __init__). Linear weights stored
    # transposed relative to nn.Linear.weight, i.e. (in_features, out_features).
    s_qkv = 1.0 / math.sqrt(d_model)
    s_fc = 1.0 / math.sqrt(n_head * d_v)
    s_w1 = 1.0 / math.sqrt(d_model)
    s_w2 = 1.0 / math.sqrt(d_inner)
    wq = jax.random.uniform(kwq, (d_model, n_head * d_k), jnp.float32, -s_qkv, s_qkv)
    wk = jax.random.uniform(kwk, (d_model, n_head * d_k), jnp.float32, -s_qkv, s_qkv)
    wv = jax.random.uniform(kwv, (d_model, n_head * d_v), jnp.float32, -s_qkv, s_qkv)
    wo = jax.random.uniform(kwo, (n_head * d_v, d_model), jnp.float32, -s_fc, s_fc)
    g1 = jnp.ones((d_model,), jnp.float32)
    be1 = jnp.zeros((d_model,), jnp.float32)
    w1 = jax.random.uniform(kw1, (d_model, d_inner), jnp.float32, -s_w1, s_w1)
    b1 = jax.random.uniform(kb1, (d_inner,), jnp.float32, -s_w1, s_w1)
    w2 = jax.random.uniform(kw2, (d_inner, d_model), jnp.float32, -s_w2, s_w2)
    b2 = jax.random.uniform(kb2, (d_model,), jnp.float32, -s_w2, s_w2)
    g2 = jnp.ones((d_model,), jnp.float32)
    be2 = jnp.zeros((d_model,), jnp.float32)
    params = (wq, wk, wv, wo, g1, be1, w1, b1, w2, b2, g2, be2)

    out, attn = encoder_layer(x, params, n_head=n_head, d_k=d_k, d_v=d_v)
    jax.block_until_ready((out, attn))

    ref_out, ref_attn = reference_encoder_layer(x, params,
                                                n_head=n_head, d_k=d_k, d_v=d_v)

    # bf16 MXU inputs + bf16 attn output + approx EUP reciprocal vs f32 reference
    # -> loosened tolerances.
    attn_f32 = attn.astype(jnp.float32)
    assert jnp.allclose(attn_f32, ref_attn, atol=3e-2, rtol=3e-2), \
        float(jnp.max(jnp.abs(attn_f32 - ref_attn)))
    assert jnp.allclose(out, ref_out, atol=5e-2, rtol=5e-2), \
        float(jnp.max(jnp.abs(out - ref_out)))

    print("KERNEL_OK")
</pallas_src>

<mosaic_0001>
module attributes {stable_mosaic.version = 11 : i64} {
  func.func @_encoder_layer_kernel(%arg0: i32, %arg1: i32, %arg2: memref<1x8x32xf32, #tpu.memory_space<vmem>>, %arg3: memref<1x8x32xbf16, #tpu.memory_space<vmem>>, %arg4: memref<32x32xbf16, #tpu.memory_space<vmem>>, %arg5: memref<32x32xbf16, #tpu.memory_space<vmem>>, %arg6: memref<32x32xbf16, #tpu.memory_space<vmem>>, %arg7: memref<4x8x32xbf16, #tpu.memory_space<vmem>>, %arg8: memref<1x32xf32, #tpu.memory_space<vmem>>, %arg9: memref<1x32xf32, #tpu.memory_space<vmem>>, %arg10: memref<32x64xbf16, #tpu.memory_space<vmem>>, %arg11: memref<1x64xf32, #tpu.memory_space<vmem>>, %arg12: memref<64x32xbf16, #tpu.memory_space<vmem>>, %arg13: memref<1x32xf32, #tpu.memory_space<vmem>>, %arg14: memref<1x32xf32, #tpu.memory_space<vmem>>, %arg15: memref<1x32xf32, #tpu.memory_space<vmem>>, %arg16: memref<1x8x32xf32, #tpu.memory_space<vmem>>, %arg17: memref<1x4x8x8xbf16, #tpu.memory_space<vmem>>, %arg18: memref<4x8x8xbf16, #tpu.memory_space<vmem>>, %arg19: memref<4x8x8xbf16, #tpu.memory_space<vmem>>) attributes {dimension_semantics = [#tpu.dimension_semantics<parallel>, #tpu.dimension_semantics<arbitrary>], iteration_bounds = array<i64: 2, 1>, scalar_prefetch = 0 : i64, scratch_operands = 2 : i64, tpu.core_type = #tpu.core_type<tc>, window_params = [{transform_indices = @transform_0, window_bounds = array<i64: 1, 8, 32>}, {transform_indices = @transform_1, window_bounds = array<i64: 1, 8, 32>}, {pipeline_mode = #tpu.pipeline_mode<synchronous>, transform_indices = @transform_2, window_bounds = array<i64: 32, 32>}, {pipeline_mode = #tpu.pipeline_mode<synchronous>, transform_indices = @transform_3, window_bounds = array<i64: 32, 32>}, {pipeline_mode = #tpu.pipeline_mode<synchronous>, transform_indices = @transform_4, window_bounds = array<i64: 32, 32>}, {pipeline_mode = #tpu.pipeline_mode<synchronous>, transform_indices = @transform_5, window_bounds = array<i64: 4, 8, 32>}, {pipeline_mode = #tpu.pipeline_mode<synchronous>, transform_indices = @transform_6, window_bounds = array<i64: 1, 32>}, {pipeline_mode = #tpu.pipeline_mode<synchronous>, transform_indices = @transform_7, window_bounds = array<i64: 1, 32>}, {pipeline_mode = #tpu.pipeline_mode<synchronous>, transform_indices = @transform_8, window_bounds = array<i64: 32, 64>}, {pipeline_mode = #tpu.pipeline_mode<synchronous>, transform_indices = @transform_9, window_bounds = array<i64: 1, 64>}, {pipeline_mode = #tpu.pipeline_mode<synchronous>, transform_indices = @transform_10, window_bounds = array<i64: 64, 32>}, {pipeline_mode = #tpu.pipeline_mode<synchronous>, transform_indices = @transform_11, window_bounds = array<i64: 1, 32>}, {pipeline_mode = #tpu.pipeline_mode<synchronous>, transform_indices = @transform_12, window_bounds = array<i64: 1, 32>}, {pipeline_mode = #tpu.pipeline_mode<synchronous>, transform_indices = @transform_13, window_bounds = array<i64: 1, 32>}, {transform_indices = @transform_14, window_bounds = array<i64: 1, 8, 32>}, {transform_indices = @transform_15, window_bounds = array<i64: 1, 4, 8, 8>}]} {
    %c0_i32 = arith.constant 0 : i32
    %0 = arith.cmpi eq, %arg1, %c0_i32 : i32
    %1 = arith.extui %0 : i1 to i32
    %c0_i32_0 = arith.constant 0 : i32
    %2 = arith.cmpi ne, %1, %c0_i32_0 : i32
    scf.if %2 {
      %c0_56 = arith.constant 0 : index
      %c0_57 = arith.constant 0 : index
      %c0_58 = arith.constant 0 : index
      %96 = vector.load %arg3[%c0_56, %c0_57, %c0_58] : memref<1x8x32xbf16, #tpu.memory_space<vmem>>, vector<1x8x32xbf16>
      %97 = vector.shape_cast %96 : vector<1x8x32xbf16> to vector<8x32xbf16>
      %c0_59 = arith.constant 0 : index
      %c0_60 = arith.constant 0 : index
      %98 = vector.load %arg5[%c0_59, %c0_60] : memref<32x32xbf16, #tpu.memory_space<vmem>>, vector<32x32xbf16>
      %cst_61 = arith.constant dense<0.000000e+00> : vector<8x32xf32>
      %99 = tpu.matmul %97, %98, %cst_61 {dimension_numbers = #tpu.dot_dimension_numbers<[1], [0], [0], [1], [0, 0, 1, 1], [], []>} : vector<8x32xbf16>, vector<32x32xbf16>, vector<8x32xf32> -> vector<8x32xf32>
      %c0_62 = arith.constant 0 : index
      %c0_63 = arith.constant 0 : index
      %100 = vector.load %arg6[%c0_62, %c0_63] : memref<32x32xbf16, #tpu.memory_space<vmem>>, vector<32x32xbf16>
      %cst_64 = arith.constant dense<0.000000e+00> : vector<8x32xf32>
      %101 = tpu.matmul %97, %100, %cst_64 {dimension_numbers = #tpu.dot_dimension_numbers<[1], [0], [0], [1], [0, 0, 1, 1], [], []>} : vector<8x32xbf16>, vector<32x32xbf16>, vector<8x32xf32> -> vector<8x32xf32>
      %102 = vector.shape_cast %99 : vector<8x32xf32> to vector<8x4x8xf32>
      %103 = tpu.transpose %102, [1, 0, 2] : vector<8x4x8xf32> -> vector<4x8x8xf32>
      %104 = arith.truncf %103 : vector<4x8x8xf32> to vector<4x8x8xbf16>
      %c0_65 = arith.constant 0 : index
      %c0_66 = arith.constant 0 : index
      %c0_67 = arith.constant 0 : index
      %105 = vector.load %arg18[%c0_65, %c0_66, %c0_67] : memref<4x8x8xbf16, #tpu.memory_space<vmem>>, vector<4x8x8xbf16>
      tpu.vector_store %arg18[%c0_65, %c0_66, %c0_67], %104 {strides = array<i32>} : memref<4x8x8xbf16, #tpu.memory_space<vmem>>, vector<4x8x8xbf16>,
      %106 = vector.shape_cast %101 : vector<8x32xf32> to vector<8x4x8xf32>
      %107 = tpu.transpose %106, [1, 0, 2] : vector<8x4x8xf32> -> vector<4x8x8xf32>
      %108 = arith.truncf %107 : vector<4x8x8xf32> to vector<4x8x8xbf16>
      %c0_68 = arith.constant 0 : index
      %c0_69 = arith.constant 0 : index
      %c0_70 = arith.constant 0 : index
      %109 = vector.load %arg19[%c0_68, %c0_69, %c0_70] : memref<4x8x8xbf16, #tpu.memory_space<vmem>>, vector<4x8x8xbf16>
      tpu.vector_store %arg19[%c0_68, %c0_69, %c0_70], %108 {strides = array<i32>} : memref<4x8x8xbf16, #tpu.memory_space<vmem>>, vector<4x8x8xbf16>,
    } else {
    }
    %c0 = arith.constant 0 : index
    %c0_1 = arith.constant 0 : index
    %c0_2 = arith.constant 0 : index
    %3 = vector.load %arg2[%c0, %c0_1, %c0_2] : memref<1x8x32xf32, #tpu.memory_space<vmem>>, vector<1x8x32xf32>
    %4 = vector.shape_cast %3 : vector<1x8x32xf32> to vector<8x32xf32>
    %5 = arith.truncf %4 : vector<8x32xf32> to vector<8x32xbf16>
    %c0_3 = arith.constant 0 : index
    %c0_4 = arith.constant 0 : index
    %6 = vector.load %arg4[%c0_3, %c0_4] : memref<32x32xbf16, #tpu.memory_space<vmem>>, vector<32x32xbf16>
    %cst = arith.constant dense<0.000000e+00> : vector<8x32xf32>
    %7 = tpu.matmul %5, %6, %cst {dimension_numbers = #tpu.dot_dimension_numbers<[1], [0], [0], [1], [0, 0, 1, 1], [], []>} : vector<8x32xbf16>, vector<32x32xbf16>, vector<8x32xf32> -> vector<8x32xf32>
    %8 = vector.shape_cast %7 : vector<8x32xf32> to vector<8x4x8xf32>
    %9 = tpu.transpose %8, [1, 0, 2] : vector<8x4x8xf32> -> vector<4x8x8xf32>
    %10 = arith.truncf %9 : vector<4x8x8xf32> to vector<4x8x8xbf16>
    %c0_5 = arith.constant 0 : index
    %c0_6 = arith.constant 0 : index
    %c0_7 = arith.constant 0 : index
    %11 = vector.load %arg18[%c0_5, %c0_6, %c0_7] : memref<4x8x8xbf16, #tpu.memory_space<vmem>>, vector<4x8x8xbf16>
    "tpu.trace_start"() <{level = 10 : i32, message = "hqd,hkd->hqk"}> : () -> ()
    %cst_8 = arith.constant dense<0.000000e+00> : vector<4x8x8xf32>
    %12 = tpu.matmul %10, %11, %cst_8 {dimension_numbers = #tpu.dot_dimension_numbers<[2], [2], [1], [1], [0, 0, 0, 1, 1, 1], [0], [0]>} : vector<4x8x8xbf16>, vector<4x8x8xbf16>, vector<4x8x8xf32> -> vector<4x8x8xf32>
    "tpu.trace_stop"() : () -> ()
    %cst_9 = arith.constant dense<0xFF800000> : vector<4x8xf32>
    %13 = vector.multi_reduction <maximumf>, %12, %cst_9 [2] : vector<4x8x8xf32> to vector<4x8xf32>
    %14 = vector.shape_cast %13 : vector<4x8xf32> to vector<4x8x1xf32>
    %15 = vector.broadcast %14 : vector<4x8x1xf32> to vector<4x8x8xf32>
    %16 = arith.subf %12, %15 : vector<4x8x8xf32>
    %17 = math.exp %16 : vector<4x8x8xf32>
    %cst_10 = arith.constant dense<0.000000e+00> : vector<4x8xf32>
    %18 = vector.multi_reduction <add>, %17, %cst_10 [2] : vector<4x8x8xf32> to vector<4x8xf32>
    %19 = vector.shape_cast %18 : vector<4x8xf32> to vector<4x8x1xf32>
    %20 = tpu.reciprocal %19 {approx = true} : vector<4x8x1xf32> -> vector<4x8x1xf32>
    %21 = vector.broadcast %20 : vector<4x8x1xf32> to vector<4x8x8xf32>
    %22 = arith.mulf %17, %21 : vector<4x8x8xf32>
    %23 = arith.truncf %22 : vector<4x8x8xf32> to vector<4x8x8xbf16>
    %c0_11 = arith.constant 0 : index
    %c0_12 = arith.constant 0 : index
    %c0_13 = arith.constant 0 : index
    %c0_14 = arith.constant 0 : index
    %24 = vector.load %arg17[%c0_11, %c0_12, %c0_13, %c0_14] : memref<1x4x8x8xbf16, #tpu.memory_space<vmem>>, vector<1x4x8x8xbf16>
    %25 = vector.shape_cast %24 : vector<1x4x8x8xbf16> to vector<4x8x8xbf16>
    %26 = vector.shape_cast %23 : vector<4x8x8xbf16> to vector<1x4x8x8xbf16>
    tpu.vector_store %arg17[%c0_11, %c0_12, %c0_13, %c0_14], %26 {strides = array<i32>} : memref<1x4x8x8xbf16, #tpu.memory_space<vmem>>, vector<1x4x8x8xbf16>,
    %c0_15 = arith.constant 0 : index
    %c0_16 = arith.constant 0 : index
    %c0_17 = arith.constant 0 : index
    %27 = vector.load %arg19[%c0_15, %c0_16, %c0_17] : memref<4x8x8xbf16, #tpu.memory_space<vmem>>, vector<4x8x8xbf16>
    "tpu.trace_start"() <{level = 10 : i32, message = "hqk,hkd->hqd"}> : () -> ()
    %cst_18 = arith.constant dense<0.000000e+00> : vector<4x8x8xf32>
    %28 = tpu.matmul %23, %27, %cst_18 {dimension_numbers = #tpu.dot_dimension_numbers<[2], [1], [1], [2], [0, 0, 0, 1, 1, 2], [0], [0]>} : vector<4x8x8xbf16>, vector<4x8x8xbf16>, vector<4x8x8xf32> -> vector<4x8x8xf32>
    "tpu.trace_stop"() : () -> ()
    %29 = arith.truncf %28 : vector<4x8x8xf32> to vector<4x8x8xbf16>
    %c0_19 = arith.constant 0 : index
    %c0_20 = arith.constant 0 : index
    %c0_21 = arith.constant 0 : index
    %30 = vector.load %arg7[%c0_19, %c0_20, %c0_21] : memref<4x8x32xbf16, #tpu.memory_space<vmem>>, vector<4x8x32xbf16>
    "tpu.trace_start"() <{level = 10 : i32, message = "hqd,hdm->hqm"}> : () -> ()
    %cst_22 = arith.constant dense<0.000000e+00> : vector<4x8x32xf32>
    %31 = tpu.matmul %29, %30, %cst_22 {dimension_numbers = #tpu.dot_dimension_numbers<[2], [1], [1], [2], [0, 0, 0, 1, 1, 2], [0], [0]>} : vector<4x8x8xbf16>, vector<4x8x32xbf16>, vector<4x8x32xf32> -> vector<4x8x32xf32>
    "tpu.trace_stop"() : () -> ()
    %cst_23 = arith.constant dense<0.000000e+00> : vector<8x32xf32>
    %32 = vector.multi_reduction <add>, %31, %cst_23 [0] : vector<4x8x32xf32> to vector<8x32xf32>
    %33 = arith.addf %32, %4 : vector<8x32xf32>
    %c0_24 = arith.constant 0 : index
    %c0_25 = arith.constant 0 : index
    %34 = vector.load %arg8[%c0_24, %c0_25] : memref<1x32xf32, #tpu.memory_space<vmem>>, vector<1x32xf32>
    %c0_26 = arith.constant 0 : index
    %c0_27 = arith.constant 0 : index
    %35 = vector.load %arg9[%c0_26, %c0_27] : memref<1x32xf32, #tpu.memory_space<vmem>>, vector<1x32xf32>
    %cst_28 = arith.constant dense<0.000000e+00> : vector<8xf32>
    %36 = vector.multi_reduction <add>, %33, %cst_28 [1] : vector<8x32xf32> to vector<8xf32>
    %37 = vector.shape_cast %36 : vector<8xf32> to vector<8x1xf32>
    %cst_29 = arith.constant 3.200000e+01 : f32
    %38 = vector.broadcast %cst_29 : f32 to vector<8x1xf32>
    %39 = arith.divf %37, %38 : vector<8x1xf32>
    %40 = vector.broadcast %39 : vector<8x1xf32> to vector<8x32xf32>
    %41 = arith.subf %33, %40 : vector<8x32xf32>
    %42 = arith.mulf %41, %41 : vector<8x32xf32>
    %cst_30 = arith.constant dense<0.000000e+00> : vector<8xf32>
    %43 = vector.multi_reduction <add>, %42, %cst_30 [1] : vector<8x32xf32> to vector<8xf32>
    %44 = vector.shape_cast %43 : vector<8xf32> to vector<8x1xf32>
    %cst_31 = arith.constant 3.200000e+01 : f32
    %45 = vector.broadcast %cst_31 : f32 to vector<8x1xf32>
    %46 = arith.divf %44, %45 : vector<8x1xf32>
    %cst_32 = arith.constant 9.99999997E-7 : f32
    %47 = vector.broadcast %cst_32 : f32 to vector<8x1xf32>
    %48 = arith.addf %46, %47 : vector<8x1xf32>
    %49 = math.rsqrt %48 : vector<8x1xf32>
    %50 = vector.broadcast %49 : vector<8x1xf32> to vector<8x32xf32>
    %51 = arith.mulf %41, %50 : vector<8x32xf32>
    %52 = vector.broadcast %34 : vector<1x32xf32> to vector<8x32xf32>
    %53 = arith.mulf %51, %52 : vector<8x32xf32>
    %54 = vector.broadcast %35 : vector<1x32xf32> to vector<8x32xf32>
    %55 = arith.addf %53, %54 : vector<8x32xf32>
    %56 = arith.truncf %55 : vector<8x32xf32> to vector<8x32xbf16>
    %c0_33 = arith.constant 0 : index
    %c0_34 = arith.constant 0 : index
    %57 = vector.load %arg10[%c0_33, %c0_34] : memref<32x64xbf16, #tpu.memory_space<vmem>>, vector<32x64xbf16>
    %cst_35 = arith.constant dense<0.000000e+00> : vector<8x64xf32>
    %58 = tpu.matmul %56, %57, %cst_35 {dimension_numbers = #tpu.dot_dimension_numbers<[1], [0], [0], [1], [0, 0, 1, 1], [], []>} : vector<8x32xbf16>, vector<32x64xbf16>, vector<8x64xf32> -> vector<8x64xf32>
    %c0_36 = arith.constant 0 : index
    %c0_37 = arith.constant 0 : index
    %59 = vector.load %arg11[%c0_36, %c0_37] : memref<1x64xf32, #tpu.memory_space<vmem>>, vector<1x64xf32>
    %60 = vector.broadcast %59 : vector<1x64xf32> to vector<8x64xf32>
    %61 = arith.addf %58, %60 : vector<8x64xf32>
    %cst_38 = arith.constant 0.000000e+00 : f32
    %62 = vector.broadcast %cst_38 : f32 to vector<8x64xf32>
    %63 = arith.maximumf %61, %62 : vector<8x64xf32>
    %64 = arith.truncf %63 : vector<8x64xf32> to vector<8x64xbf16>
    %c0_39 = arith.constant 0 : index
    %c0_40 = arith.constant 0 : index
    %65 = vector.load %arg12[%c0_39, %c0_40] : memref<64x32xbf16, #tpu.memory_space<vmem>>, vector<64x32xbf16>
    %cst_41 = arith.constant dense<0.000000e+00> : vector<8x32xf32>
    %66 = tpu.matmul %64, %65, %cst_41 {dimension_numbers = #tpu.dot_dimension_numbers<[1], [0], [0], [1], [0, 0, 1, 1], [], []>} : vector<8x64xbf16>, vector<64x32xbf16>, vector<8x32xf32> -> vector<8x32xf32>
    %c0_42 = arith.constant 0 : index
    %c0_43 = arith.constant 0 : index
    %67 = vector.load %arg13[%c0_42, %c0_43] : memref<1x32xf32, #tpu.memory_space<vmem>>, vector<1x32xf32>
    %68 = vector.broadcast %67 : vector<1x32xf32> to vector<8x32xf32>
    %69 = arith.addf %66, %68 : vector<8x32xf32>
    %70 = arith.addf %69, %55 : vector<8x32xf32>
    %c0_44 = arith.constant 0 : index
    %c0_45 = arith.constant 0 : index
    %71 = vector.load %arg14[%c0_44, %c0_45] : memref<1x32xf32, #tpu.memory_space<vmem>>, vector<1x32xf32>
    %c0_46 = arith.constant 0 : index
    %c0_47 = arith.constant 0 : index
    %72 = vector.load %arg15[%c0_46, %c0_47] : memref<1x32xf32, #tpu.memory_space<vmem>>, vector<1x32xf32>
    %cst_48 = arith.constant dense<0.000000e+00> : vector<8xf32>
    %73 = vector.multi_reduction <add>, %70, %cst_48 [1] : vector<8x32xf32> to vector<8xf32>
    %74 = vector.shape_cast %73 : vector<8xf32> to vector<8x1xf32>
    %cst_49 = arith.constant 3.200000e+01 : f32
    %75 = vector.broadcast %cst_49 : f32 to vector<8x1xf32>
    %76 = arith.divf %74, %75 : vector<8x1xf32>
    %77 = vector.broadcast %76 : vector<8x1xf32> to vector<8x32xf32>
    %78 = arith.subf %70, %77 : vector<8x32xf32>
    %79 = arith.mulf %78, %78 : vector<8x32xf32>
    %cst_50 = arith.constant dense<0.000000e+00> : vector<8xf32>
    %80 = vector.multi_reduction <add>, %79, %cst_50 [1] : vector<8x32xf32> to vector<8xf32>
    %81 = vector.shape_cast %80 : vector<8xf32> to vector<8x1xf32>
    %cst_51 = arith.constant 3.200000e+01 : f32
    %82 = vector.broadcast %cst_51 : f32 to vector<8x1xf32>
    %83 = arith.divf %81, %82 : vector<8x1xf32>
    %cst_52 = arith.constant 9.99999997E-7 : f32
    %84 = vector.broadcast %cst_52 : f32 to vector<8x1xf32>
    %85 = arith.addf %83, %84 : vector<8x1xf32>
    %86 = math.rsqrt %85 : vector<8x1xf32>
    %87 = vector.broadcast %86 : vector<8x1xf32> to vector<8x32xf32>
    %88 = arith.mulf %78, %87 : vector<8x32xf32>
    %89 = vector.broadcast %71 : vector<1x32xf32> to vector<8x32xf32>
    %90 = arith.mulf %88, %89 : vector<8x32xf32>
    %91 = vector.broadcast %72 : vector<1x32xf32> to vector<8x32xf32>
    %92 = arith.addf %90, %91 : vector<8x32xf32>
    %c0_53 = arith.constant 0 : index
    %c0_54 = arith.constant 0 : index
    %c0_55 = arith.constant 0 : index
    %93 = vector.load %arg16[%c0_53, %c0_54, %c0_55] : memref<1x8x32xf32, #tpu.memory_space<vmem>>, vector<1x8x32xf32>
    %94 = vector.shape_cast %93 : vector<1x8x32xf32> to vector<8x32xf32>
    %95 = vector.shape_cast %92 : vector<8x32xf32> to vector<1x8x32xf32>
    tpu.vector_store %arg16[%c0_53, %c0_54, %c0_55], %95 {strides = array<i32>} : memref<1x8x32xf32, #tpu.memory_space<vmem>>, vector<1x8x32xf32>,
    return
  }
  func.func @transform_0(%arg0: i32, %arg1: i32) -> (i32, i32, i32) {
    %c0_i32 = arith.constant 0 : i32
    %c0_i32_0 = arith.constant 0 : i32
    return %arg0, %arg1, %c0_i32 : i32, i32, i32
  }
  func.func @transform_1(%arg0: i32, %arg1: i32) -> (i32, i32, i32) {
    %c0_i32 = arith.constant 0 : i32
    %c0_i32_0 = arith.constant 0 : i32
    %c0_i32_1 = arith.constant 0 : i32
    return %arg0, %c0_i32, %c0_i32_0 : i32, i32, i32
  }
  func.func @transform_2(%arg0: i32, %arg1: i32) -> (i32, i32) {
    %c0_i32 = arith.constant 0 : i32
    %c0_i32_0 = arith.constant 0 : i32
    %c0_i32_1 = arith.constant 0 : i32
    return %c0_i32, %c0_i32_0 : i32, i32
  }
  func.func @transform_3(%arg0: i32, %arg1: i32) -> (i32, i32) {
    %c0_i32 = arith.constant 0 : i32
    %c0_i32_0 = arith.constant 0 : i32
    %c0_i32_1 = arith.constant 0 : i32
    return %c0_i32, %c0_i32_0 : i32, i32
  }
  func.func @transform_4(%arg0: i32, %arg1: i32) -> (i32, i32) {
    %c0_i32 = arith.constant 0 : i32
    %c0_i32_0 = arith.constant 0 : i32
    %c0_i32_1 = arith.constant 0 : i32
    return %c0_i32, %c0_i32_0 : i32, i32
  }
  func.func @transform_5(%arg0: i32, %arg1: i32) -> (i32, i32, i32) {
    %c0_i32 = arith.constant 0 : i32
    %c0_i32_0 = arith.constant 0 : i32
    %c0_i32_1 = arith.constant 0 : i32
    %c0_i32_2 = arith.constant 0 : i32
    return %c0_i32, %c0_i32_0, %c0_i32_1 : i32, i32, i32
  }
  func.func @transform_6(%arg0: i32, %arg1: i32) -> (i32, i32) {
    %c0_i32 = arith.constant 0 : i32
    %c0_i32_0 = arith.constant 0 : i32
    %c0_i32_1 = arith.constant 0 : i32
    return %c0_i32, %c0_i32_0 : i32, i32
  }
  func.func @transform_7(%arg0: i32, %arg1: i32) -> (i32, i32) {
    %c0_i32 = arith.constant 0 : i32
    %c0_i32_0 = arith.constant 0 : i32
    %c0_i32_1 = arith.constant 0 : i32
    return %c0_i32, %c0_i32_0 : i32, i32
  }
  func.func @transform_8(%arg0: i32, %arg1: i32) -> (i32, i32) {
    %c0_i32 = arith.constant 0 : i32
    %c0_i32_0 = arith.constant 0 : i32
    %c0_i32_1 = arith.constant 0 : i32
    return %c0_i32, %c0_i32_0 : i32, i32
  }
  func.func @transform_9(%arg0: i32, %arg1: i32) -> (i32, i32) {
    %c0_i32 = arith.constant 0 : i32
    %c0_i32_0 = arith.constant 0 : i32
    %c0_i32_1 = arith.constant 0 : i32
    return %c0_i32, %c0_i32_0 : i32, i32
  }
  func.func @transform_10(%arg0: i32, %arg1: i32) -> (i32, i32) {
    %c0_i32 = arith.constant 0 : i32
    %c0_i32_0 = arith.constant 0 : i32
    %c0_i32_1 = arith.constant 0 : i32
    return %c0_i32, %c0_i32_0 : i32, i32
  }
  func.func @transform_11(%arg0: i32, %arg1: i32) -> (i32, i32) {
    %c0_i32 = arith.constant 0 : i32
    %c0_i32_0 = arith.constant 0 : i32
    %c0_i32_1 = arith.constant 0 : i32
    return %c0_i32, %c0_i32_0 : i32, i32
  }
  func.func @transform_12(%arg0: i32, %arg1: i32) -> (i32, i32) {
    %c0_i32 = arith.constant 0 : i32
    %c0_i32_0 = arith.constant 0 : i32
    %c0_i32_1 = arith.constant 0 : i32
    return %c0_i32, %c0_i32_0 : i32, i32
  }
  func.func @transform_13(%arg0: i32, %arg1: i32) -> (i32, i32) {
    %c0_i32 = arith.constant 0 : i32
    %c0_i32_0 = arith.constant 0 : i32
    %c0_i32_1 = arith.constant 0 : i32
    return %c0_i32, %c0_i32_0 : i32, i32
  }
  func.func @transform_14(%arg0: i32, %arg1: i32) -> (i32, i32, i32) {
    %c0_i32 = arith.constant 0 : i32
    %c0_i32_0 = arith.constant 0 : i32
    return %arg0, %arg1, %c0_i32 : i32, i32, i32
  }
  func.func @transform_15(%arg0: i32, %arg1: i32) -> (i32, i32, i32, i32) {
    %c0_i32 = arith.constant 0 : i32
    %c0_i32_0 = arith.constant 0 : i32
    %c0_i32_1 = arith.constant 0 : i32
    return %arg0, %c0_i32, %arg1, %c0_i32_0 : i32, i32, i32, i32
  }
}

</mosaic_0001>

<llo_original>
// kernel: tpu_custom_call.1
$region0: #{tpu_custom_call.1}
  #allocation0 [shape = 'u32[]', space=smem, size = 0x4, offset = 0x4, fixed_abs, tag = 'smem constant byte address 0x4 - core index']
  #allocation1 [shape = 'u32[144,128]{1,0:T(1,128)}', space=vmem, size = 0x12000, scoped, tag = 'internal scratch']
  #allocation2 [shape = 'bf16[4,8,8]{2,1,0:T(8,128)(2,1)}', space=vmem, size = 0x2000, scoped, tag = 'scratch operand']
  #allocation3 [shape = 'bf16[4,8,8]{2,1,0:T(8,128)(2,1)}', space=vmem, size = 0x2000, scoped, tag = 'scratch operand']
  %s0 = inlined_call_operand.hbm [shape: f32[2,8,32], index: 0, kind: input, shape index: {}]
  %s1 = inlined_call_operand.hbm [shape: bf16[2,8,32], index: 1, kind: input, shape index: {}]
  %s2 = inlined_call_operand.hbm [shape: bf16[32,32], index: 2, kind: input, shape index: {}]
  %s3 = inlined_call_operand.hbm [shape: bf16[32,32], index: 3, kind: input, shape index: {}]
  %s4 = inlined_call_operand.hbm [shape: bf16[32,32], index: 4, kind: input, shape index: {}]
  %s5 = inlined_call_operand.hbm [shape: bf16[4,8,32], index: 5, kind: input, shape index: {}]
  %s6 = inlined_call_operand.hbm [shape: f32[1,32], index: 6, kind: input, shape index: {}]
  %s7 = inlined_call_operand.hbm [shape: f32[1,32], index: 7, kind: input, shape index: {}]
  %s8 = inlined_call_operand.hbm [shape: bf16[32,64], index: 8, kind: input, shape index: {}]
  %s9 = inlined_call_operand.hbm [shape: f32[1,64], index: 9, kind: input, shape index: {}]
  %s10 = inlined_call_operand.hbm [shape: bf16[64,32], index: 10, kind: input, shape index: {}]
  %s11 = inlined_call_operand.hbm [shape: f32[1,32], index: 11, kind: input, shape index: {}]
  %s12 = inlined_call_operand.hbm [shape: f32[1,32], index: 12, kind: input, shape index: {}]
  %s13 = inlined_call_operand.hbm [shape: f32[1,32], index: 13, kind: input, shape index: {}]
  %s14 = inlined_call_operand.hbm [shape: f32[2,8,32], index: 14, kind: output, shape index: {0}]
  %s15 = inlined_call_operand.hbm [shape: bf16[2,4,8,8], index: 15, kind: output, shape index: {1}]
  %16 = xla_tuple %s14, %s15
  %s17 = sld [smem:[#allocation0]]
  $region157: #{tpu_custom_call.1} parent=0
    _
  %s19 = ssub.s32 1, %s17
  %s20 = scalar_select 0, %s19, %s17
  $region1: #{tpu_custom_call.1} parent=0
    #allocation4 [shape = 'u8[8192]{0}', space=vmem, size = 0x2000, scoped, tag = 'input window, operand 0']
    #allocation5 [shape = 's32[2]{0}', space=sflag, size = 0x8, scoped, tag = 'scoped memory for tpu_custom_call.1']
    #allocation6 [shape = 's32[2]{0}', space=sflag, size = 0x8, scoped, tag = 'scoped memory for tpu_custom_call.1']
    #allocation7 [shape = 'u8[4096]{0}', space=vmem, size = 0x1000, scoped, tag = 'input window, operand 1']
    #allocation8 [shape = 's32[2]{0}', space=sflag, size = 0x8, scoped, tag = 'scoped memory for tpu_custom_call.1']
    #allocation9 [shape = 'u8[8192]{0}', space=vmem, size = 0x2000, scoped, tag = 'input window, operand 2, single buffered']
    #allocation10 [shape = 'u8[8192]{0}', space=vmem, size = 0x2000, scoped, tag = 'input window, operand 3, single buffered']
    #allocation11 [shape = 's32[1]{0}', space=sflag, size = 0x4, scoped, tag = 'scoped memory for tpu_custom_call.1']
    #allocation12 [shape = 'u8[8192]{0}', space=vmem, size = 0x2000, scoped, tag = 'input window, operand 4, single buffered']
    #allocation13 [shape = 'u8[8192]{0}', space=vmem, size = 0x2000, scoped, tag = 'input window, operand 5, single buffered']
    #allocation14 [shape = 's32[1]{0}', space=sflag, size = 0x4, scoped, tag = 'scoped memory for tpu_custom_call.1']
    #allocation15 [shape = 'u8[512]{0}', space=vmem, size = 0x400, scoped, tag = 'input window, operand 6, single buffered']
    #allocation16 [shape = 'u8[512]{0}', space=vmem, size = 0x400, scoped, tag = 'input window, operand 7, single buffered']
    #allocation17 [shape = 's32[1]{0}', space=sflag, size = 0x4, scoped, tag = 'scoped memory for tpu_custom_call.1']
    #allocation18 [shape = 'u8[8192]{0}', space=vmem, size = 0x2000, scoped, tag = 'input window, operand 8, single buffered']
    #allocation19 [shape = 'u8[512]{0}', space=vmem, size = 0x400, scoped, tag = 'input window, operand 9, single buffered']
    #allocation20 [shape = 's32[1]{0}', space=sflag, size = 0x4, scoped, tag = 'scoped memory for tpu_custom_call.1']
    #allocation21 [shape = 'u8[16384]{0}', space=vmem, size = 0x4000, scoped, tag = 'input window, operand 10, single buffered']
    #allocation22 [shape = 'u8[512]{0}', space=vmem, size = 0x400, scoped, tag = 'input window, operand 11, single buffered']
    #allocation23 [shape = 's32[1]{0}', space=sflag, size = 0x4, scoped, tag = 'scoped memory for tpu_custom_call.1']
    #allocation24 [shape = 'u8[512]{0}', space=vmem, size = 0x400, scoped, tag = 'input window, operand 12, single buffered']
    #allocation25 [shape = 'u8[512]{0}', space=vmem, size = 0x400, scoped, tag = 'input window, operand 13, single buffered']
    #allocation26 [shape = 's32[1]{0}', space=sflag, size = 0x4, scoped, tag = 'scoped memory for tpu_custom_call.1']
    #allocation27 [shape = 'u8[8192]{0}', space=vmem, size = 0x2000, scoped, tag = 'output window, operand 0']
    #allocation28 [shape = 'u8[16384]{0}', space=vmem, size = 0x4000, scoped, tag = 'output window, operand 1']
    #allocation29 [shape = 's32[2]{0}', space=sflag, size = 0x8, scoped, tag = 'scoped memory for tpu_custom_call.1']
    %21 = vsyncpa [#allocation5], 0
    %s22 = scalar_lea.sflag [#allocation5], 1
    %23 = vsyncpa %s22, 0
    %24 = vsyncpa [#allocation8], 0
    %s25 = scalar_lea.sflag [#allocation8], 1
    %26 = vsyncpa %s25, 0
    %27 = vsyncpa [#allocation11], 0
    %28 = vsyncpa [#allocation14], 0
    %29 = vsyncpa [#allocation17], 0
    %30 = vsyncpa [#allocation20], 0
    %31 = vsyncpa [#allocation23], 0
    %32 = vsyncpa [#allocation26], 0
    %33 = vsyncpa [#allocation6], 0
    %s34 = scalar_lea.sflag [#allocation6], 1
    %35 = vsyncpa %s34, 0
    %36 = vsyncpa [#allocation29], 0
    %s37 = scalar_lea.sflag [#allocation29], 1
    %38 = vsyncpa %s37, 0
    loop: start=0, step=1, limit=4
    $region2: #{tpu_custom_call.1} parent=1 // loop_pre_header
      _
    $region3: #{tpu_custom_call.1} parent=1 // loop_header
      %s40 = sphi 0, %s44
      %p41 = scmp.ge.s32.totalorder %s40, 4
      %s47 = sphi 0, %s59
      %s48 = sphi 0, %s55
      %s49 = sphi 0, %s47
      %s50 = sphi 0, %s48
      %s51 = sphi 0, %s49
      %s52 = sphi 0, %s50
      %s64 = sphi 0, %s66
      %s67 = sphi 0, %s64
      %s68 = sphi 0, %s67
      %s84 = sphi 0, %s68
      %s90 = sphi 0, %s92
      %s93 = sphi 0, %s90
      %s94 = sphi 0, %s93
      %s110 = sphi 0, %s94
      %s114 = sphi 0, %s114
      %s116 = sphi 0, %s114
      %s117 = sphi 0, %s116
      %s131 = sphi 0, %s117
      %s135 = sphi 0, %s135
      %s137 = sphi 0, %s135
      %s138 = sphi 0, %s137
      %s152 = sphi 0, %s138
      %s156 = sphi 0, %s156
      %s158 = sphi 0, %s156
      %s159 = sphi 0, %s158
      %s173 = sphi 0, %s159
      %s177 = sphi 0, %s177
      %s179 = sphi 0, %s177
      %s180 = sphi 0, %s179
      %s194 = sphi 0, %s180
      %s198 = sphi 0, %s198
      %s200 = sphi 0, %s198
      %s201 = sphi 0, %s200
      %s215 = sphi 0, %s201
      %s219 = sphi 0, %s219
      %s221 = sphi 0, %s219
      %s222 = sphi 0, %s221
      %s236 = sphi 0, %s222
      %s240 = sphi 0, %s240
      %s242 = sphi 0, %s240
      %s243 = sphi 0, %s242
      %s257 = sphi 0, %s243
      %s261 = sphi 0, %s261
      %s263 = sphi 0, %s261
      %s264 = sphi 0, %s263
      %s278 = sphi 0, %s264
      %s282 = sphi 0, %s282
      %s284 = sphi 0, %s282
      %s285 = sphi 0, %s284
      %s299 = sphi 0, %s285
      %s303 = sphi 0, %s303
      %s305 = sphi 0, %s303
      %s306 = sphi 0, %s305
      %s320 = sphi 0, %s306
      %s324 = sphi 0, %s324
      %s326 = sphi 0, %s324
      %s327 = sphi 0, %s326
      %s341 = sphi 0, %s327
      %s345 = sphi 0, %s345
      %s347 = sphi 0, %s345
      %s348 = sphi 0, %s347
      %s362 = sphi 0, %s348
      %s370 = sphi 0, %s372
      %s373 = sphi 0, %s370
      %s374 = sphi 0, %s373
      %s390 = sphi 0, %s374
      %s398 = sphi 0, %s400
      %s401 = sphi 0, %s398
      %s402 = sphi 0, %s401
      %s418 = sphi 0, %s402
    $region4: #{tpu_custom_call.1} parent=1 // loop_header_branch
      %43 = sbr.rel (%p41) target = $region8
    $region5: #{tpu_custom_call.1} parent=1 // loop_body
      %s45 = ssub.s32 %s40, 1
      %s46 = ssub.s32 %s40, 2
      %s53 = sadd.s32 1, %s48
      %p54 = scmp.ge.s32.totalorder %s53, 1
      %s55 = scalar_select %p54, 0, %s53
      %s56 = sadd.s32 1, %s47
      %s57 = scalar_select %p54, %s56, %s47
      %p58 = scmp.ge.s32.totalorder %s57, 2
      %s59 = scalar_select %p58, 0, %s57
      %s60 = ssub.s32 %s47, %s59
      %s61 = ssub.s32 %s48, %s55
      %s62 = sor.u32 %s60, %s61
      %p63 = scmp.eq.s32.totalorder %s62, 0
      %s65 = sadd.s32 %s64, 1
      %s66 = scalar_select %p63, %s64, %s65
      %p69 = pneg %p63
      %p70 = scmp.eq.s32.totalorder %s40, 1
      %p71 = por %p69, %p70
      %p72 = scmp.ne.s32.totalorder %s64, %s67
      %p73 = scmp.eq.s32.totalorder %s40, 0
      %p74 = por %p72, %p73
      %p75 = scmp.ne.s32.totalorder %s64, %s67
      %p76 = scmp.eq.s32.totalorder %s45, 1
      %p77 = por %p75, %p76
      %p78 = scmp.ne.s32.totalorder %s67, %s68
      %p79 = scmp.eq.s32.totalorder %s45, 0
      %p80 = por %p78, %p79
      %p81 = scmp.ne.s32.totalorder %s67, %s68
      %p82 = scmp.eq.s32.totalorder %s46, 1
      %p83 = por %p81, %p82
      %p85 = scmp.ne.s32.totalorder %s68, %s84
      %p86 = scmp.eq.s32.totalorder %s46, 0
      %p87 = por %p85, %p86
      %s88 = ssub.s32 %s47, %s59
      %p89 = scmp.eq.s32.totalorder %s88, 0
      %s91 = sadd.s32 %s90, 1
      %s92 = scalar_select %p89, %s90, %s91
      %p95 = pneg %p89
      %p96 = scmp.eq.s32.totalorder %s40, 1
      %p97 = por %p95, %p96
      %p98 = scmp.ne.s32.totalorder %s90, %s93
      %p99 = scmp.eq.s32.totalorder %s40, 0
      %p100 = por %p98, %p99
      %p101 = scmp.ne.s32.totalorder %s90, %s93
      %p102 = scmp.eq.s32.totalorder %s45, 1
      %p103 = por %p101, %p102
      %p104 = scmp.ne.s32.totalorder %s93, %s94
      %p105 = scmp.eq.s32.totalorder %s45, 0
      %p106 = por %p104, %p105
      %p107 = scmp.ne.s32.totalorder %s93, %s94
      %p108 = scmp.eq.s32.totalorder %s46, 1
      %p109 = por %p107, %p108
      %p111 = scmp.ne.s32.totalorder %s94, %s110
      %p112 = scmp.eq.s32.totalorder %s46, 0
      %p113 = por %p111, %p112
      %s115 = sadd.s32 %s114, 1
      %p118 = scmp.eq.s32.totalorder %s40, 1
      %p119 = scmp.ne.s32.totalorder %s114, %s116
      %p120 = scmp.eq.s32.totalorder %s40, 0
      %p121 = por %p119, %p120
      %p122 = scmp.ne.s32.totalorder %s114, %s116
      %p123 = scmp.eq.s32.totalorder %s45, 1
      %p124 = por %p122, %p123
      %p125 = scmp.ne.s32.totalorder %s116, %s117
      %p126 = scmp.eq.s32.totalorder %s45, 0
      %p127 = por %p125, %p126
      %p128 = scmp.ne.s32.totalorder %s116, %s117
      %p129 = scmp.eq.s32.totalorder %s46, 1
      %p130 = por %p128, %p129
      %p132 = scmp.ne.s32.totalorder %s117, %s131
      %p133 = scmp.eq.s32.totalorder %s46, 0
      %p134 = por %p132, %p133
      %s136 = sadd.s32 %s135, 1
      %p139 = scmp.eq.s32.totalorder %s40, 1
      %p140 = scmp.ne.s32.totalorder %s135, %s137
      %p141 = scmp.eq.s32.totalorder %s40, 0
      %p142 = por %p140, %p141
      %p143 = scmp.ne.s32.totalorder %s135, %s137
      %p144 = scmp.eq.s32.totalorder %s45, 1
      %p145 = por %p143, %p144
      %p146 = scmp.ne.s32.totalorder %s137, %s138
      %p147 = scmp.eq.s32.totalorder %s45, 0
      %p148 = por %p146, %p147
      %p149 = scmp.ne.s32.totalorder %s137, %s138
      %p150 = scmp.eq.s32.totalorder %s46, 1
      %p151 = por %p149, %p150
      %p153 = scmp.ne.s32.totalorder %s138, %s152
      %p154 = scmp.eq.s32.totalorder %s46, 0
      %p155 = por %p153, %p154
      %s157 = sadd.s32 %s156, 1
      %p160 = scmp.eq.s32.totalorder %s40, 1
      %p161 = scmp.ne.s32.totalorder %s156, %s158
      %p162 = scmp.eq.s32.totalorder %s40, 0
      %p163 = por %p161, %p162
      %p164 = scmp.ne.s32.totalorder %s156, %s158
      %p165 = scmp.eq.s32.totalorder %s45, 1
      %p166 = por %p164, %p165
      %p167 = scmp.ne.s32.totalorder %s158, %s159
      %p168 = scmp.eq.s32.totalorder %s45, 0
      %p169 = por %p167, %p168
      %p170 = scmp.ne.s32.totalorder %s158, %s159
      %p171 = scmp.eq.s32.totalorder %s46, 1
      %p172 = por %p170, %p171
      %p174 = scmp.ne.s32.totalorder %s159, %s173
      %p175 = scmp.eq.s32.totalorder %s46, 0
      %p176 = por %p174, %p175
      %s178 = sadd.s32 %s177, 1
      %p181 = scmp.eq.s32.totalorder %s40, 1
      %p182 = scmp.ne.s32.totalorder %s177, %s179
      %p183 = scmp.eq.s32.totalorder %s40, 0
      %p184 = por %p182, %p183
      %p185 = scmp.ne.s32.totalorder %s177, %s179
      %p186 = scmp.eq.s32.totalorder %s45, 1
      %p187 = por %p185, %p186
      %p188 = scmp.ne.s32.totalorder %s179, %s180
      %p189 = scmp.eq.s32.totalorder %s45, 0
      %p190 = por %p188, %p189
      %p191 = scmp.ne.s32.totalorder %s179, %s180
      %p192 = scmp.eq.s32.totalorder %s46, 1
      %p193 = por %p191, %p192
      %p195 = scmp.ne.s32.totalorder %s180, %s194
      %p196 = scmp.eq.s32.totalorder %s46, 0
      %p197 = por %p195, %p196
      %s199 = sadd.s32 %s198, 1
      %p202 = scmp.eq.s32.totalorder %s40, 1
      %p203 = scmp.ne.s32.totalorder %s198, %s200
      %p204 = scmp.eq.s32.totalorder %s40, 0
      %p205 = por %p203, %p204
      %p206 = scmp.ne.s32.totalorder %s198, %s200
      %p207 = scmp.eq.s32.totalorder %s45, 1
      %p208 = por %p206, %p207
      %p209 = scmp.ne.s32.totalorder %s200, %s201
      %p210 = scmp.eq.s32.totalorder %s45, 0
      %p211 = por %p209, %p210
      %p212 = scmp.ne.s32.totalorder %s200, %s201
      %p213 = scmp.eq.s32.totalorder %s46, 1
      %p214 = por %p212, %p213
      %p216 = scmp.ne.s32.totalorder %s201, %s215
      %p217 = scmp.eq.s32.totalorder %s46, 0
      %p218 = por %p216, %p217
      %s220 = sadd.s32 %s219, 1
      %p223 = scmp.eq.s32.totalorder %s40, 1
      %p224 = scmp.ne.s32.totalorder %s219, %s221
      %p225 = scmp.eq.s32.totalorder %s40, 0
      %p226 = por %p224, %p225
      %p227 = scmp.ne.s32.totalorder %s219, %s221
      %p228 = scmp.eq.s32.totalorder %s45, 1
      %p229 = por %p227, %p228
      %p230 = scmp.ne.s32.totalorder %s221, %s222
      %p231 = scmp.eq.s32.totalorder %s45, 0
      %p232 = por %p230, %p231
      %p233 = scmp.ne.s32.totalorder %s221, %s222
      %p234 = scmp.eq.s32.totalorder %s46, 1
      %p235 = por %p233, %p234
      %p237 = scmp.ne.s32.totalorder %s222, %s236
      %p238 = scmp.eq.s32.totalorder %s46, 0
      %p239 = por %p237, %p238
      %s241 = sadd.s32 %s240, 1
      %p244 = scmp.eq.s32.totalorder %s40, 1
      %p245 = scmp.ne.s32.totalorder %s240, %s242
      %p246 = scmp.eq.s32.totalorder %s40, 0
      %p247 = por %p245, %p246
      %p248 = scmp.ne.s32.totalorder %s240, %s242
      %p249 = scmp.eq.s32.totalorder %s45, 1
      %p250 = por %p248, %p249
      %p251 = scmp.ne.s32.totalorder %s242, %s243
      %p252 = scmp.eq.s32.totalorder %s45, 0
      %p253 = por %p251, %p252
      %p254 = scmp.ne.s32.totalorder %s242, %s243
      %p255 = scmp.eq.s32.totalorder %s46, 1
      %p256 = por %p254, %p255
      %p258 = scmp.ne.s32.totalorder %s243, %s257
      %p259 = scmp.eq.s32.totalorder %s46, 0
      %p260 = por %p258, %p259
      %s262 = sadd.s32 %s261, 1
      %p265 = scmp.eq.s32.totalorder %s40, 1
      %p266 = scmp.ne.s32.totalorder %s261, %s263
      %p267 = scmp.eq.s32.totalorder %s40, 0
      %p268 = por %p266, %p267
      %p269 = scmp.ne.s32.totalorder %s261, %s263
      %p270 = scmp.eq.s32.totalorder %s45, 1
      %p271 = por %p269, %p270
      %p272 = scmp.ne.s32.totalorder %s263, %s264
      %p273 = scmp.eq.s32.totalorder %s45, 0
      %p274 = por %p272, %p273
      %p275 = scmp.ne.s32.totalorder %s263, %s264
      %p276 = scmp.eq.s32.totalorder %s46, 1
      %p277 = por %p275, %p276
      %p279 = scmp.ne.s32.totalorder %s264, %s278
      %p280 = scmp.eq.s32.totalorder %s46, 0
      %p281 = por %p279, %p280
      %s283 = sadd.s32 %s282, 1
      %p286 = scmp.eq.s32.totalorder %s40, 1
      %p287 = scmp.ne.s32.totalorder %s282, %s284
      %p288 = scmp.eq.s32.totalorder %s40, 0
      %p289 = por %p287, %p288
      %p290 = scmp.ne.s32.totalorder %s282, %s284
      %p291 = scmp.eq.s32.totalorder %s45, 1
      %p292 = por %p290, %p291
      %p293 = scmp.ne.s32.totalorder %s284, %s285
      %p294 = scmp.eq.s32.totalorder %s45, 0
      %p295 = por %p293, %p294
      %p296 = scmp.ne.s32.totalorder %s284, %s285
      %p297 = scmp.eq.s32.totalorder %s46, 1
      %p298 = por %p296, %p297
      %p300 = scmp.ne.s32.totalorder %s285, %s299
      %p301 = scmp.eq.s32.totalorder %s46, 0
      %p302 = por %p300, %p301
      %s304 = sadd.s32 %s303, 1
      %p307 = scmp.eq.s32.totalorder %s40, 1
      %p308 = scmp.ne.s32.totalorder %s303, %s305
      %p309 = scmp.eq.s32.totalorder %s40, 0
      %p310 = por %p308, %p309
      %p311 = scmp.ne.s32.totalorder %s303, %s305
      %p312 = scmp.eq.s32.totalorder %s45, 1
      %p313 = por %p311, %p312
      %p314 = scmp.ne.s32.totalorder %s305, %s306
      %p315 = scmp.eq.s32.totalorder %s45, 0
      %p316 = por %p314, %p315
      %p317 = scmp.ne.s32.totalorder %s305, %s306
      %p318 = scmp.eq.s32.totalorder %s46, 1
      %p319 = por %p317, %p318
      %p321 = scmp.ne.s32.totalorder %s306, %s320
      %p322 = scmp.eq.s32.totalorder %s46, 0
      %p323 = por %p321, %p322
      %s325 = sadd.s32 %s324, 1
      %p328 = scmp.eq.s32.totalorder %s40, 1
      %p329 = scmp.ne.s32.totalorder %s324, %s326
      %p330 = scmp.eq.s32.totalorder %s40, 0
      %p331 = por %p329, %p330
      %p332 = scmp.ne.s32.totalorder %s324, %s326
      %p333 = scmp.eq.s32.totalorder %s45, 1
      %p334 = por %p332, %p333
      %p335 = scmp.ne.s32.totalorder %s326, %s327
      %p336 = scmp.eq.s32.totalorder %s45, 0
      %p337 = por %p335, %p336
      %p338 = scmp.ne.s32.totalorder %s326, %s327
      %p339 = scmp.eq.s32.totalorder %s46, 1
      %p340 = por %p338, %p339
      %p342 = scmp.ne.s32.totalorder %s327, %s341
      %p343 = scmp.eq.s32.totalorder %s46, 0
      %p344 = por %p342, %p343
      %s346 = sadd.s32 %s345, 1
      %p349 = scmp.eq.s32.totalorder %s40, 1
      %p350 = scmp.ne.s32.totalorder %s345, %s347
      %p351 = scmp.eq.s32.totalorder %s40, 0
      %p352 = por %p350, %p351
      %p353 = scmp.ne.s32.totalorder %s345, %s347
      %p354 = scmp.eq.s32.totalorder %s45, 1
      %p355 = por %p353, %p354
      %p356 = scmp.ne.s32.totalorder %s347, %s348
      %p357 = scmp.eq.s32.totalorder %s45, 0
      %p358 = por %p356, %p357
      %p359 = scmp.ne.s32.totalorder %s347, %s348
      %p360 = scmp.eq.s32.totalorder %s46, 1
      %p361 = por %p359, %p360
      %p363 = scmp.ne.s32.totalorder %s348, %s362
      %p364 = scmp.eq.s32.totalorder %s46, 0
      %p365 = por %p363, %p364
      %s366 = ssub.s32 %s47, %s59
      %s367 = ssub.s32 %s48, %s55
      %s368 = sor.u32 %s366, %s367
      %p369 = scmp.eq.s32.totalorder %s368, 0
      %s371 = sadd.s32 %s370, 1
      %s372 = scalar_select %p369, %s370, %s371
      %p375 = pneg %p369
      %p376 = scmp.eq.s32.totalorder %s40, 1
      %p377 = por %p375, %p376
      %p378 = scmp.ne.s32.totalorder %s370, %s373
      %p379 = scmp.eq.s32.totalorder %s40, 0
      %p380 = por %p378, %p379
      %p381 = scmp.ne.s32.totalorder %s370, %s373
      %p382 = scmp.eq.s32.totalorder %s45, 1
      %p383 = por %p381, %p382
      %p384 = scmp.ne.s32.totalorder %s373, %s374
      %p385 = scmp.eq.s32.totalorder %s45, 0
      %p386 = por %p384, %p385
      %p387 = scmp.ne.s32.totalorder %s373, %s374
      %p388 = scmp.eq.s32.totalorder %s46, 1
      %p389 = por %p387, %p388
      %p391 = scmp.ne.s32.totalorder %s374, %s390
      %p392 = scmp.eq.s32.totalorder %s46, 0
      %p393 = por %p391, %p392
      %s394 = ssub.s32 %s47, %s59
      %s395 = ssub.s32 %s48, %s55
      %s396 = sor.u32 %s394, %s395
      %p397 = scmp.eq.s32.totalorder %s396, 0
      %s399 = sadd.s32 %s398, 1
      %s400 = scalar_select %p397, %s398, %s399
      %p403 = pneg %p397
      %p404 = scmp.eq.s32.totalorder %s40, 1
      %p405 = por %p403, %p404
      %p406 = scmp.ne.s32.totalorder %s398, %s401
      %p407 = scmp.eq.s32.totalorder %s40, 0
      %p408 = por %p406, %p407
      %p409 = scmp.ne.s32.totalorder %s398, %s401
      %p410 = scmp.eq.s32.totalorder %s45, 1
      %p411 = por %p409, %p410
      %p412 = scmp.ne.s32.totalorder %s401, %s402
      %p413 = scmp.eq.s32.totalorder %s45, 0
      %p414 = por %p412, %p413
      %p415 = scmp.ne.s32.totalorder %s401, %s402
      %p416 = scmp.eq.s32.totalorder %s46, 1
      %p417 = por %p415, %p416
      %p419 = scmp.ne.s32.totalorder %s402, %s418
      %p420 = scmp.eq.s32.totalorder %s46, 0
      %p421 = por %p419, %p420
      %p422 = scmp.le.s32.totalorder 1, %s40
      %p423 = scmp.lt.s32.totalorder %s40, 3
      %p424 = pnand %p422, %p423
      %p425 = pneg %p424
      // Predicated region
      $region9: #{tpu_custom_call.1} parent=5 // pred_check
        _
      $region10: #{tpu_custom_call.1} parent=5 // pred_check_branch
        %427 = sbr.rel (%p424) target = $region12
      $region11: #{tpu_custom_call.1} parent=5 // pred_region
        %s428 = ssub.s32 %s40, 1
        // Predicated region
        $region13: #{tpu_custom_call.1} parent=11 // pred_check
          %p429 = pneg %p127
        $region14: #{tpu_custom_call.1} parent=11 // pred_check_branch
          %431 = sbr.rel (%p429) target = $region16
        $region15: #{tpu_custom_call.1} parent=11 // pred_region
          %s433 = ssub.s32 256, 256
          %434 = vsyncadd [#allocation8], %s433
          %s435 = sshll.u32 [#allocation9], 4
          %s436 = int_to_ptr.vmem [resolvable:$true] %s435
          %441 = dma.hbm_to_vmem [thread:$0]  %s2, 256, %s436, [#allocation8], 64, 64, 4
        $region16: #{tpu_custom_call.1} parent=11 // pred_fallthru
          _
        // Predicated region
        $region17: #{tpu_custom_call.1} parent=11 // pred_check
          %p442 = pneg %p148
        $region18: #{tpu_custom_call.1} parent=11 // pred_check_branch
          %444 = sbr.rel (%p442) target = $region20
        $region19: #{tpu_custom_call.1} parent=11 // pred_region
          %s446 = ssub.s32 256, 256
          %447 = vsyncadd [#allocation11], %s446
          %s448 = sshll.u32 [#allocation10], 4
          %s449 = int_to_ptr.vmem [resolvable:$true] %s448
          %454 = dma.hbm_to_vmem [thread:$0]  %s3, 256, %s449, [#allocation11], 64, 64, 4
        $region20: #{tpu_custom_call.1} parent=11 // pred_fallthru
          _
        // Predicated region
        $region21: #{tpu_custom_call.1} parent=11 // pred_check
          %p455 = pneg %p169
        $region22: #{tpu_custom_call.1} parent=11 // pred_check_branch
          %457 = sbr.rel (%p455) target = $region24
        $region23: #{tpu_custom_call.1} parent=11 // pred_region
          %s459 = ssub.s32 256, 256
          %460 = vsyncadd [#allocation11], %s459
          %s461 = sshll.u32 [#allocation12], 4
          %s462 = int_to_ptr.vmem [resolvable:$true] %s461
          %467 = dma.hbm_to_vmem [thread:$0]  %s4, 256, %s462, [#allocation11], 64, 64, 4
        $region24: #{tpu_custom_call.1} parent=11 // pred_fallthru
          _
        // Predicated region
        $region25: #{tpu_custom_call.1} parent=11 // pred_check
          %p468 = pneg %p190
        $region26: #{tpu_custom_call.1} parent=11 // pred_check_branch
          %470 = sbr.rel (%p468) target = $region28
        $region27: #{tpu_custom_call.1} parent=11 // pred_region
          %s472 = ssub.s32 256, 256
          %473 = vsyncadd [#allocation14], %s472
          %s474 = sshll.u32 [#allocation13], 4
          %s475 = int_to_ptr.vmem [resolvable:$true] %s474
          %480 = dma.hbm_to_vmem [thread:$0]  %s5, 256, %s475, [#allocation14], 64, 64, 4
        $region28: #{tpu_custom_call.1} parent=11 // pred_fallthru
          _
        // Predicated region
        $region29: #{tpu_custom_call.1} parent=11 // pred_check
          %p481 = pneg %p211
        $region30: #{tpu_custom_call.1} parent=11 // pred_check_branch
          %483 = sbr.rel (%p481) target = $region32
        $region31: #{tpu_custom_call.1} parent=11 // pred_region
          %s485 = ssub.s32 16, 16
          %486 = vsyncadd [#allocation14], %s485
          %s488 = sshll.u32 [#allocation15], 4
          %s489 = int_to_ptr.vmem [resolvable:$true] %s488
          %491 = dma.hbm_to_vmem [thread:$0]  %s6, 16, %s489, [#allocation14]
        $region32: #{tpu_custom_call.1} parent=11 // pred_fallthru
          _
        // Predicated region
        $region33: #{tpu_custom_call.1} parent=11 // pred_check
          %p492 = pneg %p232
        $region34: #{tpu_custom_call.1} parent=11 // pred_check_branch
          %494 = sbr.rel (%p492) target = $region36
        $region35: #{tpu_custom_call.1} parent=11 // pred_region
          %s496 = ssub.s32 16, 16
          %497 = vsyncadd [#allocation17], %s496
          %s499 = sshll.u32 [#allocation16], 4
          %s500 = int_to_ptr.vmem [resolvable:$true] %s499
          %502 = dma.hbm_to_vmem [thread:$0]  %s7, 16, %s500, [#allocation17]
        $region36: #{tpu_custom_call.1} parent=11 // pred_fallthru
          _
        // Predicated region
        $region37: #{tpu_custom_call.1} parent=11 // pred_check
          %p503 = pneg %p253
        $region38: #{tpu_custom_call.1} parent=11 // pred_check_branch
          %505 = sbr.rel (%p503) target = $region40
        $region39: #{tpu_custom_call.1} parent=11 // pred_region
          %s507 = ssub.s32 256, 256
          %508 = vsyncadd [#allocation17], %s507
          %s509 = sshll.u32 [#allocation18], 4
          %s510 = int_to_ptr.vmem [resolvable:$true] %s509
          %515 = dma.hbm_to_vmem [thread:$0]  %s8, 256, %s510, [#allocation17], 64, 64, 4
        $region40: #{tpu_custom_call.1} parent=11 // pred_fallthru
          _
        // Predicated region
        $region41: #{tpu_custom_call.1} parent=11 // pred_check
          %p516 = pneg %p274
        $region42: #{tpu_custom_call.1} parent=11 // pred_check_branch
          %518 = sbr.rel (%p516) target = $region44
        $region43: #{tpu_custom_call.1} parent=11 // pred_region
          %s520 = ssub.s32 16, 16
          %521 = vsyncadd [#allocation20], %s520
          %s523 = sshll.u32 [#allocation19], 4
          %s524 = int_to_ptr.vmem [resolvable:$true] %s523
          %526 = dma.hbm_to_vmem [thread:$0]  %s9, 16, %s524, [#allocation20]
        $region44: #{tpu_custom_call.1} parent=11 // pred_fallthru
          _
        // Predicated region
        $region45: #{tpu_custom_call.1} parent=11 // pred_check
          %p527 = pneg %p295
        $region46: #{tpu_custom_call.1} parent=11 // pred_check_branch
          %529 = sbr.rel (%p527) target = $region48
        $region47: #{tpu_custom_call.1} parent=11 // pred_region
          %s531 = ssub.s32 512, 512
          %532 = vsyncadd [#allocation20], %s531
          %s533 = sshll.u32 [#allocation21], 4
          %s534 = int_to_ptr.vmem [resolvable:$true] %s533
          %539 = dma.hbm_to_vmem [thread:$0]  %s10, 512, %s534, [#allocation20], 64, 64, 4
        $region48: #{tpu_custom_call.1} parent=11 // pred_fallthru
          _
        // Predicated region
        $region49: #{tpu_custom_call.1} parent=11 // pred_check
          %p540 = pneg %p316
        $region50: #{tpu_custom_call.1} parent=11 // pred_check_branch
          %542 = sbr.rel (%p540) target = $region52
        $region51: #{tpu_custom_call.1} parent=11 // pred_region
          %s544 = ssub.s32 16, 16
          %545 = vsyncadd [#allocation23], %s544
          %s547 = sshll.u32 [#allocation22], 4
          %s548 = int_to_ptr.vmem [resolvable:$true] %s547
          %550 = dma.hbm_to_vmem [thread:$0]  %s11, 16, %s548, [#allocation23]
        $region52: #{tpu_custom_call.1} parent=11 // pred_fallthru
          _
        // Predicated region
        $region53: #{tpu_custom_call.1} parent=11 // pred_check
          %p551 = pneg %p337
        $region54: #{tpu_custom_call.1} parent=11 // pred_check_branch
          %553 = sbr.rel (%p551) target = $region56
        $region55: #{tpu_custom_call.1} parent=11 // pred_region
          %s555 = ssub.s32 16, 16
          %556 = vsyncadd [#allocation23], %s555
          %s558 = sshll.u32 [#allocation24], 4
          %s559 = int_to_ptr.vmem [resolvable:$true] %s558
          %561 = dma.hbm_to_vmem [thread:$0]  %s12, 16, %s559, [#allocation23]
        $region56: #{tpu_custom_call.1} parent=11 // pred_fallthru
          _
        // Predicated region
        $region57: #{tpu_custom_call.1} parent=11 // pred_check
          %p562 = pneg %p358
        $region58: #{tpu_custom_call.1} parent=11 // pred_check_branch
          %564 = sbr.rel (%p562) target = $region60
        $region59: #{tpu_custom_call.1} parent=11 // pred_region
          %s566 = ssub.s32 16, 16
          %567 = vsyncadd [#allocation26], %s566
          %s569 = sshll.u32 [#allocation25], 4
          %s570 = int_to_ptr.vmem [resolvable:$true] %s569
          %572 = dma.hbm_to_vmem [thread:$0]  %s13, 16, %s570, [#allocation26]
        $region60: #{tpu_custom_call.1} parent=11 // pred_fallthru
          _
      $region12: #{tpu_custom_call.1} parent=5 // pred_fallthru
        _
      %p573 = scmp.lt.s32.totalorder %s40, 2
      // Predicated region
      $region61: #{tpu_custom_call.1} parent=5 // pred_check
        %p574 = pneg %p573
      $region62: #{tpu_custom_call.1} parent=5 // pred_check_branch
        %576 = sbr.rel (%p574) target = $region64
      $region63: #{tpu_custom_call.1} parent=5 // pred_region
        // Predicated region
        $region65: #{tpu_custom_call.1} parent=63 // pred_check
          %p577 = pneg %p74
        $region66: #{tpu_custom_call.1} parent=63 // pred_check_branch
          %579 = sbr.rel (%p577) target = $region68
        $region67: #{tpu_custom_call.1} parent=63 // pred_region
          %s580 = sand.u32 %s64, 1
          %s581 = scalar_lea.sflag [#allocation5], %s580
          %s582 = sand.u32 %s64, 1
          %s583 = smul.addr %s582, 8
          %s584 = scalar_lea.vmem [#allocation4], %s583
          %s586 = ssub.s32 128, 128
          %587 = vsyncadd %s581, %s586
          %s588 = sadd.s32 %s48, %s47
          %s589 = smul.addr %s588, 128
          %s590 = scalar_lea.hbm %s0, %s589
          %s592 = sshll.u32 %s584, 4
          %s593 = int_to_ptr.vmem [resolvable:$true] %s592
          %595 = dma.hbm_to_vmem [thread:$0]  %s590, 128, %s593, %s581
        $region68: #{tpu_custom_call.1} parent=63 // pred_fallthru
          _
        // Predicated region
        $region69: #{tpu_custom_call.1} parent=63 // pred_check
          %p596 = pneg %p100
        $region70: #{tpu_custom_call.1} parent=63 // pred_check_branch
          %598 = sbr.rel (%p596) target = $region72
        $region71: #{tpu_custom_call.1} parent=63 // pred_region
          %s599 = sand.u32 %s40, 1
          %s600 = scalar_lea.sflag [#allocation8], %s599
          %s601 = sand.u32 %s90, 1
          %s602 = smul.addr %s601, 4
          %s603 = scalar_lea.vmem [#allocation7], %s602
          %s605 = ssub.s32 64, 64
          %606 = vsyncadd %s600, %s605
          %s607 = smul.addr %s47, 64
          %s608 = scalar_lea.hbm %s1, %s607
          %s610 = sshll.u32 %s603, 4
          %s611 = int_to_ptr.vmem [resolvable:$true] %s610
          %613 = dma.hbm_to_vmem [thread:$0]  %s608, 64, %s611, %s600
        $region72: #{tpu_custom_call.1} parent=63 // pred_fallthru
          _
      $region64: #{tpu_custom_call.1} parent=5 // pred_fallthru
        _
      %p614 = scmp.le.s32.totalorder 1, %s40
      %p615 = scmp.lt.s32.totalorder %s40, 3
      %p616 = pnand %p614, %p615
      %p617 = pneg %p616
      // Predicated region
      $region73: #{tpu_custom_call.1} parent=5 // pred_check
        _
      $region74: #{tpu_custom_call.1} parent=5 // pred_check_branch
        %619 = sbr.rel (%p616) target = $region76
      $region75: #{tpu_custom_call.1} parent=5 // pred_region
        %s620 = ssub.s32 %s40, 1
        %s621 = sand.u32 %s67, 1
        %s622 = scalar_lea.sflag [#allocation5], %s621
        %s623 = sand.u32 %s67, 1
        %s624 = smul.addr %s623, 8
        %s625 = scalar_lea.vmem [#allocation4], %s624
        // Predicated region
        $region77: #{tpu_custom_call.1} parent=75 // pred_check
          %p626 = pneg %p80
        $region78: #{tpu_custom_call.1} parent=75 // pred_check_branch
          %628 = sbr.rel (%p626) target = $region80
        $region79: #{tpu_custom_call.1} parent=75 // pred_region
          %629 = dma.done %s622, 128
        $region80: #{tpu_custom_call.1} parent=75 // pred_fallthru
          _
        %s630 = sand.u32 %s45, 1
        %s631 = scalar_lea.sflag [#allocation8], %s630
        %s632 = sand.u32 %s93, 1
        %s633 = smul.addr %s632, 4
        %s634 = scalar_lea.vmem [#allocation7], %s633
        // Predicated region
        $region81: #{tpu_custom_call.1} parent=75 // pred_check
          %p635 = pneg %p106
        $region82: #{tpu_custom_call.1} parent=75 // pred_check_branch
          %637 = sbr.rel (%p635) target = $region84
        $region83: #{tpu_custom_call.1} parent=75 // pred_region
          %638 = dma.done %s631, 64
        $region84: #{tpu_custom_call.1} parent=75 // pred_fallthru
          _
        // Predicated region
        $region85: #{tpu_custom_call.1} parent=75 // pred_check
          %p639 = pneg %p127
        $region86: #{tpu_custom_call.1} parent=75 // pred_check_branch
          %641 = sbr.rel (%p639) target = $region88
        $region87: #{tpu_custom_call.1} parent=75 // pred_region
          %642 = dma.done [#allocation8], 256
        $region88: #{tpu_custom_call.1} parent=75 // pred_fallthru
          _
        // Predicated region
        $region89: #{tpu_custom_call.1} parent=75 // pred_check
          %p643 = pneg %p148
        $region90: #{tpu_custom_call.1} parent=75 // pred_check_branch
          %645 = sbr.rel (%p643) target = $region92
        $region91: #{tpu_custom_call.1} parent=75 // pred_region
          %646 = dma.done [#allocation11], 256
        $region92: #{tpu_custom_call.1} parent=75 // pred_fallthru
          _
        // Predicated region
        $region93: #{tpu_custom_call.1} parent=75 // pred_check
          %p647 = pneg %p169
        $region94: #{tpu_custom_call.1} parent=75 // pred_check_branch
          %649 = sbr.rel (%p647) target = $region96
        $region95: #{tpu_custom_call.1} parent=75 // pred_region
          %650 = dma.done [#allocation11], 256
        $region96: #{tpu_custom_call.1} parent=75 // pred_fallthru
          _
        // Predicated region
        $region97: #{tpu_custom_call.1} parent=75 // pred_check
          %p651 = pneg %p190
        $region98: #{tpu_custom_call.1} parent=75 // pred_check_branch
          %653 = sbr.rel (%p651) target = $region100
        $region99: #{tpu_custom_call.1} parent=75 // pred_region
          %654 = dma.done [#allocation14], 256
        $region100: #{tpu_custom_call.1} parent=75 // pred_fallthru
          _
        // Predicated region
        $region101: #{tpu_custom_call.1} parent=75 // pred_check
          %p655 = pneg %p211
        $region102: #{tpu_custom_call.1} parent=75 // pred_check_branch
          %657 = sbr.rel (%p655) target = $region104
        $region103: #{tpu_custom_call.1} parent=75 // pred_region
          %658 = dma.done [#allocation14], 16
        $region104: #{tpu_custom_call.1} parent=75 // pred_fallthru
          _
        // Predicated region
        $region105: #{tpu_custom_call.1} parent=75 // pred_check
          %p659 = pneg %p232
        $region106: #{tpu_custom_call.1} parent=75 // pred_check_branch
          %661 = sbr.rel (%p659) target = $region108
        $region107: #{tpu_custom_call.1} parent=75 // pred_region
          %662 = dma.done [#allocation17], 16
        $region108: #{tpu_custom_call.1} parent=75 // pred_fallthru
          _
        // Predicated region
        $region109: #{tpu_custom_call.1} parent=75 // pred_check
          %p663 = pneg %p253
        $region110: #{tpu_custom_call.1} parent=75 // pred_check_branch
          %665 = sbr.rel (%p663) target = $region112
        $region111: #{tpu_custom_call.1} parent=75 // pred_region
          %666 = dma.done [#allocation17], 256
        $region112: #{tpu_custom_call.1} parent=75 // pred_fallthru
          _
        // Predicated region
        $region113: #{tpu_custom_call.1} parent=75 // pred_check
          %p667 = pneg %p274
        $region114: #{tpu_custom_call.1} parent=75 // pred_check_branch
          %669 = sbr.rel (%p667) target = $region116
        $region115: #{tpu_custom_call.1} parent=75 // pred_region
          %670 = dma.done [#allocation20], 16
        $region116: #{tpu_custom_call.1} parent=75 // pred_fallthru
          _
        // Predicated region
        $region117: #{tpu_custom_call.1} parent=75 // pred_check
          %p671 = pneg %p295
        $region118: #{tpu_custom_call.1} parent=75 // pred_check_branch
          %673 = sbr.rel (%p671) target = $region120
        $region119: #{tpu_custom_call.1} parent=75 // pred_region
          %674 = dma.done [#allocation20], 512
        $region120: #{tpu_custom_call.1} parent=75 // pred_fallthru
          _
        // Predicated region
        $region121: #{tpu_custom_call.1} parent=75 // pred_check
          %p675 = pneg %p316
        $region122: #{tpu_custom_call.1} parent=75 // pred_check_branch
          %677 = sbr.rel (%p675) target = $region124
        $region123: #{tpu_custom_call.1} parent=75 // pred_region
          %678 = dma.done [#allocation23], 16
        $region124: #{tpu_custom_call.1} parent=75 // pred_fallthru
          _
        // Predicated region
        $region125: #{tpu_custom_call.1} parent=75 // pred_check
          %p679 = pneg %p337
        $region126: #{tpu_custom_call.1} parent=75 // pred_check_branch
          %681 = sbr.rel (%p679) target = $region128
        $region127: #{tpu_custom_call.1} parent=75 // pred_region
          %682 = dma.done [#allocation23], 16
        $region128: #{tpu_custom_call.1} parent=75 // pred_fallthru
          _
        // Predicated region
        $region129: #{tpu_custom_call.1} parent=75 // pred_check
          %p683 = pneg %p358
        $region130: #{tpu_custom_call.1} parent=75 // pred_check_branch
          %685 = sbr.rel (%p683) target = $region132
        $region131: #{tpu_custom_call.1} parent=75 // pred_region
          %686 = dma.done [#allocation26], 16
        $region132: #{tpu_custom_call.1} parent=75 // pred_fallthru
          _
        %s687 = sand.u32 %s67, 1
        %s688 = scalar_lea.sflag [#allocation5], %s687
        %s689 = sand.u32 %s67, 1
        %s690 = smul.addr %s689, 8
        %s691 = scalar_lea.vmem [#allocation4], %s690
        %p692 = pneg %p80
        %p693 = pneg %p77
        %s694 = sand.u32 %s45, 1
        %s695 = scalar_lea.sflag [#allocation8], %s694
        %s696 = sand.u32 %s93, 1
        %s697 = smul.addr %s696, 4
        %s698 = scalar_lea.vmem [#allocation7], %s697
        %p699 = pneg %p106
        %p700 = pneg %p103
        %p701 = pneg %p127
        %p702 = pneg %p124
        %p703 = pneg %p148
        %p704 = pneg %p145
        %p705 = pneg %p169
        %p706 = pneg %p166
        %p707 = pneg %p190
        %p708 = pneg %p187
        %p709 = pneg %p211
        %p710 = pneg %p208
        %p711 = pneg %p232
        %p712 = pneg %p229
        %p713 = pneg %p253
        %p714 = pneg %p250
        %p715 = pneg %p274
        %p716 = pneg %p271
        %p717 = pneg %p295
        %p718 = pneg %p292
        %p719 = pneg %p316
        %p720 = pneg %p313
        %p721 = pneg %p337
        %p722 = pneg %p334
        %p723 = pneg %p358
        %p724 = pneg %p355
        %p725 = pneg %p386
        %p726 = pneg %p383
        %s727 = sand.u32 %s373, 1
        %s728 = scalar_lea.sflag [#allocation6], %s727
        %s729 = sand.u32 %s373, 1
        %s730 = smul.addr %s729, 8
        %s731 = scalar_lea.vmem [#allocation27], %s730
        %p732 = pneg %p414
        %p733 = pneg %p411
        %s734 = sand.u32 %s401, 1
        %s735 = scalar_lea.sflag [#allocation29], %s734
        %s736 = sand.u32 %s401, 1
        %s737 = smul.addr %s736, 16
        %s738 = scalar_lea.vmem [#allocation28], %s737
        %p740 = scmp.eq.s32.totalorder %s50, 0
        // Predicated region
        $region133: #{tpu_custom_call.1} parent=75 // pred_check
          %p741 = pneg %p740
        $region134: #{tpu_custom_call.1} parent=75 // pred_check_branch
          %743 = sbr.rel (%p741) target = $region136
        $region135: #{tpu_custom_call.1} parent=75 // pred_region
          %v744 = vld [vmem:[%s634] sm:$0xf]
          %v745 = vld [vmem:[#allocation10] sm:$0xf]
          %v746 = vld [vmem:[#allocation10 + $0x4] sm:$0xf]
          %v747 = vld [vmem:[#allocation10 + $0x8] sm:$0xf]
          %v748 = vld [vmem:[#allocation10 + $0xc] sm:$0xf]
          %v753 = vunpack.c.l.b16 %v745
          %v754 = vunpack.c.l.b16 %v746
          %v755 = vunpack.c.l.b16 %v747
          %v756 = vunpack.c.l.b16 %v748
          %v757 = vpack.c.b16 %v754, %v753
          %v758 = vpack.c.b16 %v756, %v755
          %vm761 = vcmask 261120
          %v763 = vsel %vm761, %v744, 0
          %765 = vmatprep.subr.bf16.mxu0 0
          %766 = vmatpush1.bf16.msra.mxu0 %v757
          %767 = vmatprep.subr.bf16.mxu0 0
          %768 = vmatpush1.bf16.msra.mxu0 %v758
          %769 = vmatprep.subr.bf16.mxu0 0
          %770 = vmatpush1.bf16.msra.mxu0 0
          %771 = vmatprep.subr.bf16.mxu0 0
          %772 = vmatpush1.bf16.msra.mxu0 0
          %773 = vmatprep.subr.bf16.mxu0 0
          %774 = vmatpush1.bf16.msra.mxu0 0
          %775 = vmatprep.subr.bf16.mxu0 0
          %776 = vmatpush1.bf16.msra.mxu0 0
          %777 = vmatprep.subr.bf16.mxu0 0
          %778 = vmatpush1.bf16.msra.mxu0 0
          %779 = vmatprep.subr.bf16.mxu0 0
          %780 = vmatpush1.bf16.msra.mxu0 0
          %781 = vmatprep.subr.bf16.mxu0 0
          %782 = vmatpush1.bf16.msra.mxu0 0
          %783 = vmatprep.subr.bf16.mxu0 0
          %784 = vmatpush1.bf16.msra.mxu0 0
          %785 = vmatprep.subr.bf16.mxu0 0
          %786 = vmatpush1.bf16.msra.mxu0 0
          %787 = vmatprep.subr.bf16.mxu0 0
          %788 = vmatpush1.bf16.msra.mxu0 0
          %789 = vmatprep.subr.bf16.mxu0 0
          %790 = vmatpush1.bf16.msra.mxu0 0
          %791 = vmatprep.subr.bf16.mxu0 0
          %792 = vmatpush1.bf16.msra.mxu0 0
          %793 = vmatprep.subr.bf16.mxu0 0
          %794 = vmatpush1.bf16.msra.mxu0 0
          %795 = vmatprep.subr.bf16.mxu0 0
          %796 = vmatpush1.bf16.msra.mxu0 0
          %797 = vmatprep.mubr.bf16.mxu0 0
          %798 = vmatmul.mubr.bf16.gmra.mrb[0].mxu0 %v763
          %v799 = vpop.f32.mrb[0].mxu0
          %v800 = vadd.f32 0.0, %v799
          %v801 = vpop.f32.mrb[0].mxu0
          %v802 = vpop.f32.mrb[0].mxu0
          %v803 = vpop.f32.mrb[0].mxu0
          %804 = vdwg.mxu0
          %v805 = vld [vmem:[#allocation12] sm:$0xf]
          %v806 = vld [vmem:[#allocation12 + $0x4] sm:$0xf]
          %v807 = vld [vmem:[#allocation12 + $0x8] sm:$0xf]
          %v808 = vld [vmem:[#allocation12 + $0xc] sm:$0xf]
          %v813 = vunpack.c.l.b16 %v805
          %v814 = vunpack.c.l.b16 %v806
          %v815 = vunpack.c.l.b16 %v807
          %v816 = vunpack.c.l.b16 %v808
          %v817 = vpack.c.b16 %v814, %v813
          %v818 = vpack.c.b16 %v816, %v815
          %821 = vmatprep.subr.bf16.mxu0 0
          %822 = vmatpush1.bf16.msra.mxu0 %v817
          %823 = vmatprep.subr.bf16.mxu0 0
          %824 = vmatpush1.bf16.msra.mxu0 %v818
          %825 = vmatprep.subr.bf16.mxu0 0
          %826 = vmatpush1.bf16.msra.mxu0 0
          %827 = vmatprep.subr.bf16.mxu0 0
          %828 = vmatpush1.bf16.msra.mxu0 0
          %829 = vmatprep.subr.bf16.mxu0 0
          %830 = vmatpush1.bf16.msra.mxu0 0
          %831 = vmatprep.subr.bf16.mxu0 0
          %832 = vmatpush1.bf16.msra.mxu0 0
          %833 = vmatprep.subr.bf16.mxu0 0
          %834 = vmatpush1.bf16.msra.mxu0 0
          %835 = vmatprep.subr.bf16.mxu0 0
          %836 = vmatpush1.bf16.msra.mxu0 0
          %837 = vmatprep.subr.bf16.mxu0 0
          %838 = vmatpush1.bf16.msra.mxu0 0
          %839 = vmatprep.subr.bf16.mxu0 0
          %840 = vmatpush1.bf16.msra.mxu0 0
          %841 = vmatprep.subr.bf16.mxu0 0
          %842 = vmatpush1.bf16.msra.mxu0 0
          %843 = vmatprep.subr.bf16.mxu0 0
          %844 = vmatpush1.bf16.msra.mxu0 0
          %845 = vmatprep.subr.bf16.mxu0 0
          %846 = vmatpush1.bf16.msra.mxu0 0
          %847 = vmatprep.subr.bf16.mxu0 0
          %848 = vmatpush1.bf16.msra.mxu0 0
          %849 = vmatprep.subr.bf16.mxu0 0
          %850 = vmatpush1.bf16.msra.mxu0 0
          %851 = vmatprep.subr.bf16.mxu0 0
          %852 = vmatpush1.bf16.msra.mxu0 0
          %853 = vmatprep.mubr.bf16.mxu0 0
          %854 = vmatmul.mubr.bf16.gmra.mrb[0].mxu0 %v763
          %v855 = vpop.f32.mrb[0].mxu0
          %v856 = vadd.f32 0.0, %v855
          %v857 = vpop.f32.mrb[0].mxu0
          %v858 = vpop.f32.mrb[0].mxu0
          %v859 = vpop.f32.mrb[0].mxu0
          %860 = vdwg.mxu0
          %862 = vrot.lane.b32.xlu0 %v800, 120
          %v863 = vpop.permute.xlu0 %862
          %865 = vrot.lane.b32.xlu0 %v800, 112
          %v866 = vpop.permute.xlu0 %865
          %868 = vrot.lane.b32.xlu0 %v800, 104
          %v869 = vpop.permute.xlu0 %868
          %v871 = vcombine.low %v800, %v866
          %v872 = vcombine.high %v800, %v866
          %v874 = vunpack.c.l.s4 1983009808
          %v875 = vunpack.c.0.s8 %v874
          %v876 = vlaneseq
          %v877 = vshrl.u32 %v876, 7
          %v878 = vsub.s32 %v875, %v877
          %v879 = vrot.slane %v871, %v878
          %v881 = vunpack.c.l.s4 1983009808
          %v882 = vunpack.c.0.s8 %v881
          %v883 = vlaneseq
          %v884 = vshrl.u32 %v883, 7
          %v885 = vsub.s32 %v882, %v884
          %v886 = vrot.slane %v872, %v885
          %v887 = vcombine.low %v863, %v869
          %v888 = vcombine.high %v863, %v869
          %v890 = vunpack.c.l.s4 1983009808
          %v891 = vunpack.c.0.s8 %v890
          %v892 = vlaneseq
          %v893 = vshrl.u32 %v892, 7
          %v894 = vsub.s32 %v891, %v893
          %v895 = vrot.slane %v887, %v894
          %v897 = vunpack.c.l.s4 1983009808
          %v898 = vunpack.c.0.s8 %v897
          %v899 = vlaneseq
          %v900 = vshrl.u32 %v899, 7
          %v901 = vsub.s32 %v898, %v900
          %v902 = vrot.slane %v888, %v901
          %v903 = vcombine.low %v879, %v895
          %v904 = vcombine.high %v879, %v895
          %v906 = vunpack.c.l.s4 1934713408
          %v907 = vunpack.c.0.s8 %v906
          %v908 = vlaneseq
          %v909 = vshrl.u32 %v908, 7
          %v910 = vsub.s32 %v907, %v909
          %v911 = vrot.slane %v903, %v910
          %v913 = vunpack.c.l.s4 1934713408
          %v914 = vunpack.c.0.s8 %v913
          %v915 = vlaneseq
          %v916 = vshrl.u32 %v915, 7
          %v917 = vsub.s32 %v914, %v916
          %v918 = vrot.slane %v904, %v917
          %v919 = vcombine.low %v886, %v902
          %v920 = vcombine.high %v886, %v902
          %v922 = vunpack.c.l.s4 1934713408
          %v923 = vunpack.c.0.s8 %v922
          %v924 = vlaneseq
          %v925 = vshrl.u32 %v924, 7
          %v926 = vsub.s32 %v923, %v925
          %v927 = vrot.slane %v919, %v926
          %v929 = vunpack.c.l.s4 1934713408
          %v930 = vunpack.c.0.s8 %v929
          %v931 = vlaneseq
          %v932 = vshrl.u32 %v931, 7
          %v933 = vsub.s32 %v930, %v932
          %v934 = vrot.slane %v920, %v933
          %v935 = vcombine.high %v911, 0.0
          %v936 = vcombine.high %v918, 0.0
          %v937 = vcombine.high %v927, 0.0
          %v938 = vcombine.high %v934, 0.0
          %v939 = vcombine.low %v911, %v918
          %v941 = vunpack.c.l.s4 1983009808
          %v942 = vunpack.c.0.s8 %v941
          %v943 = vlaneseq
          %v944 = vshrl.u32 %v943, 7
          %v945 = vsub.s32 %v942, %v944
          %v946 = vrot.slane %v939, %v945
          %v947 = vcombine.low %v935, %v936
          %v949 = vunpack.c.l.s4 1983009808
          %v950 = vunpack.c.0.s8 %v949
          %v951 = vlaneseq
          %v952 = vshrl.u32 %v951, 7
          %v953 = vsub.s32 %v950, %v952
          %v954 = vrot.slane %v947, %v953
          %v955 = vcombine.low %v927, %v934
          %v957 = vunpack.c.l.s4 1983009808
          %v958 = vunpack.c.0.s8 %v957
          %v959 = vlaneseq
          %v960 = vshrl.u32 %v959, 7
          %v961 = vsub.s32 %v958, %v960
          %v962 = vrot.slane %v955, %v961
          %v963 = vcombine.low %v937, %v938
          %v965 = vunpack.c.l.s4 1983009808
          %v966 = vunpack.c.0.s8 %v965
          %v967 = vlaneseq
          %v968 = vshrl.u32 %v967, 7
          %v969 = vsub.s32 %v966, %v968
          %v970 = vrot.slane %v963, %v969
          %v971 = vcombine.low %v946, %v954
          %v972 = vcombine.high %v946, %v954
          %v974 = vunpack.c.l.s4 1934713408
          %v975 = vunpack.c.0.s8 %v974
          %v976 = vlaneseq
          %v977 = vshrl.u32 %v976, 7
          %v978 = vsub.s32 %v975, %v977
          %v979 = vrot.slane %v971, %v978
          %v981 = vunpack.c.l.s4 1934713408
          %v982 = vunpack.c.0.s8 %v981
          %v983 = vlaneseq
          %v984 = vshrl.u32 %v983, 7
          %v985 = vsub.s32 %v982, %v984
          %v986 = vrot.slane %v972, %v985
          %v987 = vcombine.low %v962, %v970
          %v988 = vcombine.high %v962, %v970
          %v990 = vunpack.c.l.s4 1934713408
          %v991 = vunpack.c.0.s8 %v990
          %v992 = vlaneseq
          %v993 = vshrl.u32 %v992, 7
          %v994 = vsub.s32 %v991, %v993
          %v995 = vrot.slane %v987, %v994
          %v997 = vunpack.c.l.s4 1934713408
          %v998 = vunpack.c.0.s8 %v997
          %v999 = vlaneseq
          %v1000 = vshrl.u32 %v999, 7
          %v1001 = vsub.s32 %v998, %v1000
          %v1002 = vrot.slane %v988, %v1001
          %v1003 = vcombine.low %v979, %v995
          %v1004 = vcombine.high %v979, %v995
          %v1005 = vcombine.low %v986, %v1002
          %v1006 = vcombine.high %v986, %v1002
          %v1007 = vpack.c.bf16 %v1003, %v1003
          %v1008 = vpack.c.bf16 %v1004, %v1004
          %v1009 = vpack.c.bf16 %v1005, %v1005
          %v1010 = vpack.c.bf16 %v1006, %v1006
          %vm1011 = vcmask 60416
          %1012 = vst.msk [vmem:[#allocation2] sm:$0xf] %vm1011, %v1007
          %1013 = vst.msk [vmem:[#allocation2 + $0x4] sm:$0xf] %vm1011, %v1008
          %1014 = vst.msk [vmem:[#allocation2 + $0x8] sm:$0xf] %vm1011, %v1009
          %1015 = vst.msk [vmem:[#allocation2 + $0xc] sm:$0xf] %vm1011, %v1010
          %1017 = vrot.lane.b32.xlu0 %v856, 120
          %v1018 = vpop.permute.xlu0 %1017
          %1020 = vrot.lane.b32.xlu0 %v856, 112
          %v1021 = vpop.permute.xlu0 %1020
          %1023 = vrot.lane.b32.xlu0 %v856, 104
          %v1024 = vpop.permute.xlu0 %1023
          %v1026 = vcombine.low %v856, %v1021
          %v1027 = vcombine.high %v856, %v1021
          %v1029 = vunpack.c.l.s4 1983009808
          %v1030 = vunpack.c.0.s8 %v1029
          %v1031 = vlaneseq
          %v1032 = vshrl.u32 %v1031, 7
          %v1033 = vsub.s32 %v1030, %v1032
          %v1034 = vrot.slane %v1026, %v1033
          %v1036 = vunpack.c.l.s4 1983009808
          %v1037 = vunpack.c.0.s8 %v1036
          %v1038 = vlaneseq
          %v1039 = vshrl.u32 %v1038, 7
          %v1040 = vsub.s32 %v1037, %v1039
          %v1041 = vrot.slane %v1027, %v1040
          %v1042 = vcombine.low %v1018, %v1024
          %v1043 = vcombine.high %v1018, %v1024
          %v1045 = vunpack.c.l.s4 1983009808
          %v1046 = vunpack.c.0.s8 %v1045
          %v1047 = vlaneseq
          %v1048 = vshrl.u32 %v1047, 7
          %v1049 = vsub.s32 %v1046, %v1048
          %v1050 = vrot.slane %v1042, %v1049
          %v1052 = vunpack.c.l.s4 1983009808
          %v1053 = vunpack.c.0.s8 %v1052
          %v1054 = vlaneseq
          %v1055 = vshrl.u32 %v1054, 7
          %v1056 = vsub.s32 %v1053, %v1055
          %v1057 = vrot.slane %v1043, %v1056
          %v1058 = vcombine.low %v1034, %v1050
          %v1059 = vcombine.high %v1034, %v1050
          %v1061 = vunpack.c.l.s4 1934713408
          %v1062 = vunpack.c.0.s8 %v1061
          %v1063 = vlaneseq
          %v1064 = vshrl.u32 %v1063, 7
          %v1065 = vsub.s32 %v1062, %v1064
          %v1066 = vrot.slane %v1058, %v1065
          %v1068 = vunpack.c.l.s4 1934713408
          %v1069 = vunpack.c.0.s8 %v1068
          %v1070 = vlaneseq
          %v1071 = vshrl.u32 %v1070, 7
          %v1072 = vsub.s32 %v1069, %v1071
          %v1073 = vrot.slane %v1059, %v1072
          %v1074 = vcombine.low %v1041, %v1057
          %v1075 = vcombine.high %v1041, %v1057
          %v1077 = vunpack.c.l.s4 1934713408
          %v1078 = vunpack.c.0.s8 %v1077
          %v1079 = vlaneseq
          %v1080 = vshrl.u32 %v1079, 7
          %v1081 = vsub.s32 %v1078, %v1080
          %v1082 = vrot.slane %v1074, %v1081
          %v1084 = vunpack.c.l.s4 1934713408
          %v1085 = vunpack.c.0.s8 %v1084
          %v1086 = vlaneseq
          %v1087 = vshrl.u32 %v1086, 7
          %v1088 = vsub.s32 %v1085, %v1087
          %v1089 = vrot.slane %v1075, %v1088
          %v1090 = vcombine.high %v1066, 0.0
          %v1091 = vcombine.high %v1073, 0.0
          %v1092 = vcombine.high %v1082, 0.0
          %v1093 = vcombine.high %v1089, 0.0
          %v1094 = vcombine.low %v1066, %v1073
          %v1096 = vunpack.c.l.s4 1983009808
          %v1097 = vunpack.c.0.s8 %v1096
          %v1098 = vlaneseq
          %v1099 = vshrl.u32 %v1098, 7
          %v1100 = vsub.s32 %v1097, %v1099
          %v1101 = vrot.slane %v1094, %v1100
          %v1102 = vcombine.low %v1090, %v1091
          %v1104 = vunpack.c.l.s4 1983009808
          %v1105 = vunpack.c.0.s8 %v1104
          %v1106 = vlaneseq
          %v1107 = vshrl.u32 %v1106, 7
          %v1108 = vsub.s32 %v1105, %v1107
          %v1109 = vrot.slane %v1102, %v1108
          %v1110 = vcombine.low %v1082, %v1089
          %v1112 = vunpack.c.l.s4 1983009808
          %v1113 = vunpack.c.0.s8 %v1112
          %v1114 = vlaneseq
          %v1115 = vshrl.u32 %v1114, 7
          %v1116 = vsub.s32 %v1113, %v1115
          %v1117 = vrot.slane %v1110, %v1116
          %v1118 = vcombine.low %v1092, %v1093
          %v1120 = vunpack.c.l.s4 1983009808
          %v1121 = vunpack.c.0.s8 %v1120
          %v1122 = vlaneseq
          %v1123 = vshrl.u32 %v1122, 7
          %v1124 = vsub.s32 %v1121, %v1123
          %v1125 = vrot.slane %v1118, %v1124
          %v1126 = vcombine.low %v1101, %v1109
          %v1127 = vcombine.high %v1101, %v1109
          %v1129 = vunpack.c.l.s4 1934713408
          %v1130 = vunpack.c.0.s8 %v1129
          %v1131 = vlaneseq
          %v1132 = vshrl.u32 %v1131, 7
          %v1133 = vsub.s32 %v1130, %v1132
          %v1134 = vrot.slane %v1126, %v1133
          %v1136 = vunpack.c.l.s4 1934713408
          %v1137 = vunpack.c.0.s8 %v1136
          %v1138 = vlaneseq
          %v1139 = vshrl.u32 %v1138, 7
          %v1140 = vsub.s32 %v1137, %v1139
          %v1141 = vrot.slane %v1127, %v1140
          %v1142 = vcombine.low %v1117, %v1125
          %v1143 = vcombine.high %v1117, %v1125
          %v1145 = vunpack.c.l.s4 1934713408
          %v1146 = vunpack.c.0.s8 %v1145
          %v1147 = vlaneseq
          %v1148 = vshrl.u32 %v1147, 7
          %v1149 = vsub.s32 %v1146, %v1148
          %v1150 = vrot.slane %v1142, %v1149
          %v1152 = vunpack.c.l.s4 1934713408
          %v1153 = vunpack.c.0.s8 %v1152
          %v1154 = vlaneseq
          %v1155 = vshrl.u32 %v1154, 7
          %v1156 = vsub.s32 %v1153, %v1155
          %v1157 = vrot.slane %v1143, %v1156
          %v1158 = vcombine.low %v1134, %v1150
          %v1159 = vcombine.high %v1134, %v1150
          %v1160 = vcombine.low %v1141, %v1157
          %v1161 = vcombine.high %v1141, %v1157
          %v1162 = vpack.c.bf16 %v1158, %v1158
          %v1163 = vpack.c.bf16 %v1159, %v1159
          %v1164 = vpack.c.bf16 %v1160, %v1160
          %v1165 = vpack.c.bf16 %v1161, %v1161
          %1166 = vst.msk [vmem:[#allocation3] sm:$0xf] %vm1011, %v1162
          %1167 = vst.msk [vmem:[#allocation3 + $0x4] sm:$0xf] %vm1011, %v1163
          %1168 = vst.msk [vmem:[#allocation3 + $0x8] sm:$0xf] %vm1011, %v1164
          %1169 = vst.msk [vmem:[#allocation3 + $0xc] sm:$0xf] %vm1011, %v1165
        $region136: #{tpu_custom_call.1} parent=75 // pred_fallthru
          _
        %v1170 = vld [vmem:[%s625] sm:$0xff]
        %v1171 = vpack.c.bf16 %v1170, %v1170
        %v1172 = vld [vmem:[#allocation9] sm:$0xf]
        %v1173 = vld [vmem:[#allocation9 + $0x4] sm:$0xf]
        %v1174 = vld [vmem:[#allocation9 + $0x8] sm:$0xf]
        %v1175 = vld [vmem:[#allocation9 + $0xc] sm:$0xf]
        %v1180 = vunpack.c.l.b16 %v1172
        %v1181 = vunpack.c.l.b16 %v1173
        %v1182 = vunpack.c.l.b16 %v1174
        %v1183 = vunpack.c.l.b16 %v1175
        %v1184 = vpack.c.b16 %v1181, %v1180
        %v1185 = vpack.c.b16 %v1183, %v1182
        %vm1188 = vcmask 261120
        %v1190 = vsel %vm1188, %v1171, 0
        %1192 = vmatprep.subr.bf16.mxu0 0
        %1193 = vmatpush1.bf16.msra.mxu0 %v1184
        %1194 = vmatprep.subr.bf16.mxu0 0
        %1195 = vmatpush1.bf16.msra.mxu0 %v1185
        %1196 = vmatprep.subr.bf16.mxu0 0
        %1197 = vmatpush1.bf16.msra.mxu0 0
        %1198 = vmatprep.subr.bf16.mxu0 0
        %1199 = vmatpush1.bf16.msra.mxu0 0
        %1200 = vmatprep.subr.bf16.mxu0 0
        %1201 = vmatpush1.bf16.msra.mxu0 0
        %1202 = vmatprep.subr.bf16.mxu0 0
        %1203 = vmatpush1.bf16.msra.mxu0 0
        %1204 = vmatprep.subr.bf16.mxu0 0
        %1205 = vmatpush1.bf16.msra.mxu0 0
        %1206 = vmatprep.subr.bf16.mxu0 0
        %1207 = vmatpush1.bf16.msra.mxu0 0
        %1208 = vmatprep.subr.bf16.mxu0 0
        %1209 = vmatpush1.bf16.msra.mxu0 0
        %1210 = vmatprep.subr.bf16.mxu0 0
        %1211 = vmatpush1.bf16.msra.mxu0 0
        %1212 = vmatprep.subr.bf16.mxu0 0
        %1213 = vmatpush1.bf16.msra.mxu0 0
        %1214 = vmatprep.subr.bf16.mxu0 0
        %1215 = vmatpush1.bf16.msra.mxu0 0
        %1216 = vmatprep.subr.bf16.mxu0 0
        %1217 = vmatpush1.bf16.msra.mxu0 0
        %1218 = vmatprep.subr.bf16.mxu0 0
        %1219 = vmatpush1.bf16.msra.mxu0 0
        %1220 = vmatprep.subr.bf16.mxu0 0
        %1221 = vmatpush1.bf16.msra.mxu0 0
        %1222 = vmatprep.subr.bf16.mxu0 0
        %1223 = vmatpush1.bf16.msra.mxu0 0
        %1224 = vmatprep.mubr.bf16.mxu0 0
        %1225 = vmatmul.mubr.bf16.gmra.mrb[0].mxu0 %v1190
        %v1226 = vpop.f32.mrb[0].mxu0
        %v1227 = vadd.f32 0.0, %v1226
        %v1228 = vpop.f32.mrb[0].mxu0
        %v1229 = vpop.f32.mrb[0].mxu0
        %v1230 = vpop.f32.mrb[0].mxu0
        %1231 = vdwg.mxu0
        %1233 = vrot.lane.b32.xlu0 %v1227, 120
        %v1234 = vpop.permute.xlu0 %1233
        %1236 = vrot.lane.b32.xlu0 %v1227, 112
        %v1237 = vpop.permute.xlu0 %1236
        %1239 = vrot.lane.b32.xlu0 %v1227, 104
        %v1240 = vpop.permute.xlu0 %1239
        %v1242 = vcombine.low %v1227, %v1237
        %v1243 = vcombine.high %v1227, %v1237
        %v1245 = vunpack.c.l.s4 1983009808
        %v1246 = vunpack.c.0.s8 %v1245
        %v1247 = vlaneseq
        %v1248 = vshrl.u32 %v1247, 7
        %v1249 = vsub.s32 %v1246, %v1248
        %v1250 = vrot.slane %v1242, %v1249
        %v1252 = vunpack.c.l.s4 1983009808
        %v1253 = vunpack.c.0.s8 %v1252
        %v1254 = vlaneseq
        %v1255 = vshrl.u32 %v1254, 7
        %v1256 = vsub.s32 %v1253, %v1255
        %v1257 = vrot.slane %v1243, %v1256
        %v1258 = vcombine.low %v1234, %v1240
        %v1259 = vcombine.high %v1234, %v1240
        %v1261 = vunpack.c.l.s4 1983009808
        %v1262 = vunpack.c.0.s8 %v1261
        %v1263 = vlaneseq
        %v1264 = vshrl.u32 %v1263, 7
        %v1265 = vsub.s32 %v1262, %v1264
        %v1266 = vrot.slane %v1258, %v1265
        %v1268 = vunpack.c.l.s4 1983009808
        %v1269 = vunpack.c.0.s8 %v1268
        %v1270 = vlaneseq
        %v1271 = vshrl.u32 %v1270, 7
        %v1272 = vsub.s32 %v1269, %v1271
        %v1273 = vrot.slane %v1259, %v1272
        %v1274 = vcombine.low %v1250, %v1266
        %v1275 = vcombine.high %v1250, %v1266
        %v1277 = vunpack.c.l.s4 1934713408
        %v1278 = vunpack.c.0.s8 %v1277
        %v1279 = vlaneseq
        %v1280 = vshrl.u32 %v1279, 7
        %v1281 = vsub.s32 %v1278, %v1280
        %v1282 = vrot.slane %v1274, %v1281
        %v1284 = vunpack.c.l.s4 1934713408
        %v1285 = vunpack.c.0.s8 %v1284
        %v1286 = vlaneseq
        %v1287 = vshrl.u32 %v1286, 7
        %v1288 = vsub.s32 %v1285, %v1287
        %v1289 = vrot.slane %v1275, %v1288
        %v1290 = vcombine.low %v1257, %v1273
        %v1291 = vcombine.high %v1257, %v1273
        %v1293 = vunpack.c.l.s4 1934713408
        %v1294 = vunpack.c.0.s8 %v1293
        %v1295 = vlaneseq
        %v1296 = vshrl.u32 %v1295, 7
        %v1297 = vsub.s32 %v1294, %v1296
        %v1298 = vrot.slane %v1290, %v1297
        %v1300 = vunpack.c.l.s4 1934713408
        %v1301 = vunpack.c.0.s8 %v1300
        %v1302 = vlaneseq
        %v1303 = vshrl.u32 %v1302, 7
        %v1304 = vsub.s32 %v1301, %v1303
        %v1305 = vrot.slane %v1291, %v1304
        %v1306 = vcombine.high %v1282, 0.0
        %v1307 = vcombine.high %v1289, 0.0
        %v1308 = vcombine.high %v1298, 0.0
        %v1309 = vcombine.high %v1305, 0.0
        %v1310 = vcombine.low %v1282, %v1289
        %v1312 = vunpack.c.l.s4 1983009808
        %v1313 = vunpack.c.0.s8 %v1312
        %v1314 = vlaneseq
        %v1315 = vshrl.u32 %v1314, 7
        %v1316 = vsub.s32 %v1313, %v1315
        %v1317 = vrot.slane %v1310, %v1316
        %v1318 = vcombine.low %v1306, %v1307
        %v1320 = vunpack.c.l.s4 1983009808
        %v1321 = vunpack.c.0.s8 %v1320
        %v1322 = vlaneseq
        %v1323 = vshrl.u32 %v1322, 7
        %v1324 = vsub.s32 %v1321, %v1323
        %v1325 = vrot.slane %v1318, %v1324
        %v1326 = vcombine.low %v1298, %v1305
        %v1328 = vunpack.c.l.s4 1983009808
        %v1329 = vunpack.c.0.s8 %v1328
        %v1330 = vlaneseq
        %v1331 = vshrl.u32 %v1330, 7
        %v1332 = vsub.s32 %v1329, %v1331
        %v1333 = vrot.slane %v1326, %v1332
        %v1334 = vcombine.low %v1308, %v1309
        %v1336 = vunpack.c.l.s4 1983009808
        %v1337 = vunpack.c.0.s8 %v1336
        %v1338 = vlaneseq
        %v1339 = vshrl.u32 %v1338, 7
        %v1340 = vsub.s32 %v1337, %v1339
        %v1341 = vrot.slane %v1334, %v1340
        %v1342 = vcombine.low %v1317, %v1325
        %v1343 = vcombine.high %v1317, %v1325
        %v1345 = vunpack.c.l.s4 1934713408
        %v1346 = vunpack.c.0.s8 %v1345
        %v1347 = vlaneseq
        %v1348 = vshrl.u32 %v1347, 7
        %v1349 = vsub.s32 %v1346, %v1348
        %v1350 = vrot.slane %v1342, %v1349
        %v1352 = vunpack.c.l.s4 1934713408
        %v1353 = vunpack.c.0.s8 %v1352
        %v1354 = vlaneseq
        %v1355 = vshrl.u32 %v1354, 7
        %v1356 = vsub.s32 %v1353, %v1355
        %v1357 = vrot.slane %v1343, %v1356
        %v1358 = vcombine.low %v1333, %v1341
        %v1359 = vcombine.high %v1333, %v1341
        %v1361 = vunpack.c.l.s4 1934713408
        %v1362 = vunpack.c.0.s8 %v1361
        %v1363 = vlaneseq
        %v1364 = vshrl.u32 %v1363, 7
        %v1365 = vsub.s32 %v1362, %v1364
        %v1366 = vrot.slane %v1358, %v1365
        %v1368 = vunpack.c.l.s4 1934713408
        %v1369 = vunpack.c.0.s8 %v1368
        %v1370 = vlaneseq
        %v1371 = vshrl.u32 %v1370, 7
        %v1372 = vsub.s32 %v1369, %v1371
        %v1373 = vrot.slane %v1359, %v1372
        %v1374 = vcombine.low %v1350, %v1366
        %v1375 = vcombine.high %v1350, %v1366
        %v1376 = vcombine.low %v1357, %v1373
        %v1377 = vcombine.high %v1357, %v1373
        %v1378 = vpack.c.bf16 %v1374, %v1374
        %v1379 = vpack.c.bf16 %v1375, %v1375
        %v1380 = vpack.c.bf16 %v1376, %v1376
        %v1381 = vpack.c.bf16 %v1377, %v1377
        %v1382 = vld [vmem:[#allocation2] sm:$0xf]
        %v1383 = vld [vmem:[#allocation2 + $0x4] sm:$0xf]
        %v1384 = vld [vmem:[#allocation2 + $0x8] sm:$0xf]
        %v1385 = vld [vmem:[#allocation2 + $0xc] sm:$0xf]
        %vm1386 = vcmask 64512
        %v1388 = vsel %vm1386, %v1378, 0
        %v1391 = vsel %vm1386, %v1382, 0
        %1393 = vmatprep.subr.bf16.mxu0 0
        %1394 = vmatpush1.bf16.xpose.msra.mxu0 %v1391
        %1395 = vmatprep.subr.bf16.mxu0 0
        %1396 = vmatpush1.bf16.xpose.msra.mxu0 0
        %1397 = vmatprep.subr.bf16.mxu0 0
        %1398 = vmatpush1.bf16.xpose.msra.mxu0 0
        %1399 = vmatprep.subr.bf16.mxu0 0
        %1400 = vmatpush1.bf16.xpose.msra.mxu0 0
        %1401 = vmatprep.subr.bf16.mxu0 0
        %1402 = vmatpush1.bf16.xpose.msra.mxu0 0
        %1403 = vmatprep.subr.bf16.mxu0 0
        %1404 = vmatpush1.bf16.xpose.msra.mxu0 0
        %1405 = vmatprep.subr.bf16.mxu0 0
        %1406 = vmatpush1.bf16.xpose.msra.mxu0 0
        %1407 = vmatprep.subr.bf16.mxu0 0
        %1408 = vmatpush1.bf16.xpose.msra.mxu0 0
        %1409 = vmatprep.subr.bf16.mxu0 0
        %1410 = vmatpush1.bf16.xpose.msra.mxu0 0
        %1411 = vmatprep.subr.bf16.mxu0 0
        %1412 = vmatpush1.bf16.xpose.msra.mxu0 0
        %1413 = vmatprep.subr.bf16.mxu0 0
        %1414 = vmatpush1.bf16.xpose.msra.mxu0 0
        %1415 = vmatprep.subr.bf16.mxu0 0
        %1416 = vmatpush1.bf16.xpose.msra.mxu0 0
        %1417 = vmatprep.subr.bf16.mxu0 0
        %1418 = vmatpush1.bf16.xpose.msra.mxu0 0
        %1419 = vmatprep.subr.bf16.mxu0 0
        %1420 = vmatpush1.bf16.xpose.msra.mxu0 0
        %1421 = vmatprep.subr.bf16.mxu0 0
        %1422 = vmatpush1.bf16.xpose.msra.mxu0 0
        %1423 = vmatprep.subr.bf16.mxu0 0
        %1424 = vmatpush1.bf16.xpose.msra.mxu0 0
        %1425 = vmatprep.mubr.bf16.mxu0 0
        %1426 = vmatmul.mubr.bf16.gmra.mrb[0].mxu0 %v1388
        %v1427 = vpop.f32.mrb[0].mxu0
        %v1428 = vadd.f32 0.0, %v1427
        %v1429 = vpop.f32.mrb[0].mxu0
        %v1430 = vpop.f32.mrb[0].mxu0
        %v1431 = vpop.f32.mrb[0].mxu0
        %1432 = vdwg.mxu0
        %v1434 = vsel %vm1386, %v1379, 0
        %v1437 = vsel %vm1386, %v1383, 0
        %1439 = vmatprep.subr.bf16.mxu0 0
        %1440 = vmatpush1.bf16.xpose.msra.mxu0 %v1437
        %1441 = vmatprep.subr.bf16.mxu0 0
        %1442 = vmatpush1.bf16.xpose.msra.mxu0 0
        %1443 = vmatprep.subr.bf16.mxu0 0
        %1444 = vmatpush1.bf16.xpose.msra.mxu0 0
        %1445 = vmatprep.subr.bf16.mxu0 0
        %1446 = vmatpush1.bf16.xpose.msra.mxu0 0
        %1447 = vmatprep.subr.bf16.mxu0 0
        %1448 = vmatpush1.bf16.xpose.msra.mxu0 0
        %1449 = vmatprep.subr.bf16.mxu0 0
        %1450 = vmatpush1.bf16.xpose.msra.mxu0 0
        %1451 = vmatprep.subr.bf16.mxu0 0
        %1452 = vmatpush1.bf16.xpose.msra.mxu0 0
        %1453 = vmatprep.subr.bf16.mxu0 0
        %1454 = vmatpush1.bf16.xpose.msra.mxu0 0
        %1455 = vmatprep.subr.bf16.mxu0 0
        %1456 = vmatpush1.bf16.xpose.msra.mxu0 0
        %1457 = vmatprep.subr.bf16.mxu0 0
        %1458 = vmatpush1.bf16.xpose.msra.mxu0 0
        %1459 = vmatprep.subr.bf16.mxu0 0
        %1460 = vmatpush1.bf16.xpose.msra.mxu0 0
        %1461 = vmatprep.subr.bf16.mxu0 0
        %1462 = vmatpush1.bf16.xpose.msra.mxu0 0
        %1463 = vmatprep.subr.bf16.mxu0 0
        %1464 = vmatpush1.bf16.xpose.msra.mxu0 0
        %1465 = vmatprep.subr.bf16.mxu0 0
        %1466 = vmatpush1.bf16.xpose.msra.mxu0 0
        %1467 = vmatprep.subr.bf16.mxu0 0
        %1468 = vmatpush1.bf16.xpose.msra.mxu0 0
        %1469 = vmatprep.subr.bf16.mxu0 0
        %1470 = vmatpush1.bf16.xpose.msra.mxu0 0
        %1471 = vmatprep.mubr.bf16.mxu0 0
        %1472 = vmatmul.mubr.bf16.gmra.mrb[0].mxu0 %v1434
        %v1473 = vpop.f32.mrb[0].mxu0
        %v1474 = vadd.f32 0.0, %v1473
        %v1475 = vpop.f32.mrb[0].mxu0
        %v1476 = vpop.f32.mrb[0].mxu0
        %v1477 = vpop.f32.mrb[0].mxu0
        %1478 = vdwg.mxu0
        %v1480 = vsel %vm1386, %v1380, 0
        %v1483 = vsel %vm1386, %v1384, 0
        %1485 = vmatprep.subr.bf16.mxu0 0
        %1486 = vmatpush1.bf16.xpose.msra.mxu0 %v1483
        %1487 = vmatprep.subr.bf16.mxu0 0
        %1488 = vmatpush1.bf16.xpose.msra.mxu0 0
        %1489 = vmatprep.subr.bf16.mxu0 0
        %1490 = vmatpush1.bf16.xpose.msra.mxu0 0
        %1491 = vmatprep.subr.bf16.mxu0 0
        %1492 = vmatpush1.bf16.xpose.msra.mxu0 0
        %1493 = vmatprep.subr.bf16.mxu0 0
        %1494 = vmatpush1.bf16.xpose.msra.mxu0 0
        %1495 = vmatprep.subr.bf16.mxu0 0
        %1496 = vmatpush1.bf16.xpose.msra.mxu0 0
        %1497 = vmatprep.subr.bf16.mxu0 0
        %1498 = vmatpush1.bf16.xpose.msra.mxu0 0
        %1499 = vmatprep.subr.bf16.mxu0 0
        %1500 = vmatpush1.bf16.xpose.msra.mxu0 0
        %1501 = vmatprep.subr.bf16.mxu0 0
        %1502 = vmatpush1.bf16.xpose.msra.mxu0 0
        %1503 = vmatprep.subr.bf16.mxu0 0
        %1504 = vmatpush1.bf16.xpose.msra.mxu0 0
        %1505 = vmatprep.subr.bf16.mxu0 0
        %1506 = vmatpush1.bf16.xpose.msra.mxu0 0
        %1507 = vmatprep.subr.bf16.mxu0 0
        %1508 = vmatpush1.bf16.xpose.msra.mxu0 0
        %1509 = vmatprep.subr.bf16.mxu0 0
        %1510 = vmatpush1.bf16.xpose.msra.mxu0 0
        %1511 = vmatprep.subr.bf16.mxu0 0
        %1512 = vmatpush1.bf16.xpose.msra.mxu0 0
        %1513 = vmatprep.subr.bf16.mxu0 0
        %1514 = vmatpush1.bf16.xpose.msra.mxu0 0
        %1515 = vmatprep.subr.bf16.mxu0 0
        %1516 = vmatpush1.bf16.xpose.msra.mxu0 0
        %1517 = vmatprep.mubr.bf16.mxu0 0
        %1518 = vmatmul.mubr.bf16.gmra.mrb[0].mxu0 %v1480
        %v1519 = vpop.f32.mrb[0].mxu0
        %v1520 = vadd.f32 0.0, %v1519
        %v1521 = vpop.f32.mrb[0].mxu0
        %v1522 = vpop.f32.mrb[0].mxu0
        %v1523 = vpop.f32.mrb[0].mxu0
        %1524 = vdwg.mxu0
        %v1526 = vsel %vm1386, %v1381, 0
        %v1529 = vsel %vm1386, %v1385, 0
        %1531 = vmatprep.subr.bf16.mxu0 0
        %1532 = vmatpush1.bf16.xpose.msra.mxu0 %v1529
        %1533 = vmatprep.subr.bf16.mxu0 0
        %1534 = vmatpush1.bf16.xpose.msra.mxu0 0
        %1535 = vmatprep.subr.bf16.mxu0 0
        %1536 = vmatpush1.bf16.xpose.msra.mxu0 0
        %1537 = vmatprep.subr.bf16.mxu0 0
        %1538 = vmatpush1.bf16.xpose.msra.mxu0 0
        %1539 = vmatprep.subr.bf16.mxu0 0
        %1540 = vmatpush1.bf16.xpose.msra.mxu0 0
        %1541 = vmatprep.subr.bf16.mxu0 0
        %1542 = vmatpush1.bf16.xpose.msra.mxu0 0
        %1543 = vmatprep.subr.bf16.mxu0 0
        %1544 = vmatpush1.bf16.xpose.msra.mxu0 0
        %1545 = vmatprep.subr.bf16.mxu0 0
        %1546 = vmatpush1.bf16.xpose.msra.mxu0 0
        %1547 = vmatprep.subr.bf16.mxu0 0
        %1548 = vmatpush1.bf16.xpose.msra.mxu0 0
        %1549 = vmatprep.subr.bf16.mxu0 0
        %1550 = vmatpush1.bf16.xpose.msra.mxu0 0
        %1551 = vmatprep.subr.bf16.mxu0 0
        %1552 = vmatpush1.bf16.xpose.msra.mxu0 0
        %1553 = vmatprep.subr.bf16.mxu0 0
        %1554 = vmatpush1.bf16.xpose.msra.mxu0 0
        %1555 = vmatprep.subr.bf16.mxu0 0
        %1556 = vmatpush1.bf16.xpose.msra.mxu0 0
        %1557 = vmatprep.subr.bf16.mxu0 0
        %1558 = vmatpush1.bf16.xpose.msra.mxu0 0
        %1559 = vmatprep.subr.bf16.mxu0 0
        %1560 = vmatpush1.bf16.xpose.msra.mxu0 0
        %1561 = vmatprep.subr.bf16.mxu0 0
        %1562 = vmatpush1.bf16.xpose.msra.mxu0 0
        %1563 = vmatprep.mubr.bf16.mxu0 0
        %1564 = vmatmul.mubr.bf16.gmra.mrb[0].mxu0 %v1526
        %v1565 = vpop.f32.mrb[0].mxu0
        %v1566 = vadd.f32 0.0, %v1565
        %v1567 = vpop.f32.mrb[0].mxu0
        %v1568 = vpop.f32.mrb[0].mxu0
        %v1569 = vpop.f32.mrb[0].mxu0
        %1570 = vdwg.mxu0
        %v1571 = vsel %vm1386, %v1428, -inf
        %1572 = vmax.xlane.f32.xlu0 %v1571
        %v1573 = vpop.xlane.xlu0 %1572
        %v1574 = vsel %vm1386, %v1474, -inf
        %1575 = vmax.xlane.f32.xlu0 %v1574
        %v1576 = vpop.xlane.xlu0 %1575
        %v1577 = vsel %vm1386, %v1520, -inf
        %1578 = vmax.xlane.f32.xlu0 %v1577
        %v1579 = vpop.xlane.xlu0 %1578
        %v1580 = vsel %vm1386, %v1566, -inf
        %1581 = vmax.xlane.f32.xlu0 %v1580
        %v1582 = vpop.xlane.xlu0 %1581
        %v1583 = vsub.f32 %v1428, %v1573
        %v1584 = vsub.f32 %v1474, %v1576
        %v1585 = vsub.f32 %v1520, %v1579
        %v1586 = vsub.f32 %v1566, %v1582
        %v1587 = vmul.f32 %v1583, 1.442695
        %v1588 = vpow.pop %v1587
        %v1589 = vmul.f32 %v1584, 1.442695
        %v1590 = vpow.pop %v1589
        %v1591 = vmul.f32 %v1585, 1.442695
        %v1592 = vpow.pop %v1591
        %v1593 = vmul.f32 %v1586, 1.442695
        %v1594 = vpow.pop %v1593
        %v1595 = vsel %vm1386, %v1588, 0.0
        %1596 = vadd.xlane.f32.xlu0 %v1595
        %v1597 = vpop.xlane.xlu0 %1596
        %v1598 = vsel %vm1386, %v1590, 0.0
        %1599 = vadd.xlane.f32.xlu0 %v1598
        %v1600 = vpop.xlane.xlu0 %1599
        %v1601 = vsel %vm1386, %v1592, 0.0
        %1602 = vadd.xlane.f32.xlu0 %v1601
        %v1603 = vpop.xlane.xlu0 %1602
        %v1604 = vsel %vm1386, %v1594, 0.0
        %1605 = vadd.xlane.f32.xlu0 %v1604
        %v1606 = vpop.xlane.xlu0 %1605
        %v1607 = vrcp.pop %v1597
        %v1608 = vrcp.pop %v1600
        %v1609 = vrcp.pop %v1603
        %v1610 = vrcp.pop %v1606
        %v1611 = vmul.f32 %v1588, %v1607
        %v1612 = vmul.f32 %v1590, %v1608
        %v1613 = vmul.f32 %v1592, %v1609
        %v1614 = vmul.f32 %v1594, %v1610
        %v1615 = vpack.c.bf16 %v1611, %v1611
        %v1616 = vpack.c.bf16 %v1612, %v1612
        %v1617 = vpack.c.bf16 %v1613, %v1613
        %v1618 = vpack.c.bf16 %v1614, %v1614
        %vm1619 = vcmask 60416
        %1620 = vst.msk [vmem:[%s738] sm:$0xf] %vm1619, %v1615
        %1621 = vst.msk [vmem:[%s738 + $0x4] sm:$0xf] %vm1619, %v1616
        %1622 = vst.msk [vmem:[%s738 + $0x8] sm:$0xf] %vm1619, %v1617
        %1623 = vst.msk [vmem:[%s738 + $0xc] sm:$0xf] %vm1619, %v1618
        %v1624 = vld [vmem:[#allocation3] sm:$0xf]
        %v1625 = vld [vmem:[#allocation3 + $0x4] sm:$0xf]
        %v1626 = vld [vmem:[#allocation3 + $0x8] sm:$0xf]
        %v1627 = vld [vmem:[#allocation3 + $0xc] sm:$0xf]
        %v1629 = vsel %vm1386, %v1615, 0
        %vm1631 = vcmask 1043456
        %v1633 = vsel %vm1631, %v1624, 0
        %1635 = vmatprep.subr.bf16.mxu0 0
        %1636 = vmatpush1.bf16.msra.mxu0 %v1633
        %1637 = vmatprep.subr.bf16.mxu0 0
        %1638 = vmatpush1.bf16.msra.mxu0 0
        %1639 = vmatprep.subr.bf16.mxu0 0
        %1640 = vmatpush1.bf16.msra.mxu0 0
        %1641 = vmatprep.subr.bf16.mxu0 0
        %1642 = vmatpush1.bf16.msra.mxu0 0
        %1643 = vmatprep.subr.bf16.mxu0 0
        %1644 = vmatpush1.bf16.msra.mxu0 0
        %1645 = vmatprep.subr.bf16.mxu0 0
        %1646 = vmatpush1.bf16.msra.mxu0 0
        %1647 = vmatprep.subr.bf16.mxu0 0
        %1648 = vmatpush1.bf16.msra.mxu0 0
        %1649 = vmatprep.subr.bf16.mxu0 0
        %1650 = vmatpush1.bf16.msra.mxu0 0
        %1651 = vmatprep.subr.bf16.mxu0 0
        %1652 = vmatpush1.bf16.msra.mxu0 0
        %1653 = vmatprep.subr.bf16.mxu0 0
        %1654 = vmatpush1.bf16.msra.mxu0 0
        %1655 = vmatprep.subr.bf16.mxu0 0
        %1656 = vmatpush1.bf16.msra.mxu0 0
        %1657 = vmatprep.subr.bf16.mxu0 0
        %1658 = vmatpush1.bf16.msra.mxu0 0
        %1659 = vmatprep.subr.bf16.mxu0 0
        %1660 = vmatpush1.bf16.msra.mxu0 0
        %1661 = vmatprep.subr.bf16.mxu0 0
        %1662 = vmatpush1.bf16.msra.mxu0 0
        %1663 = vmatprep.subr.bf16.mxu0 0
        %1664 = vmatpush1.bf16.msra.mxu0 0
        %1665 = vmatprep.subr.bf16.mxu0 0
        %1666 = vmatpush1.bf16.msra.mxu0 0
        %1667 = vmatprep.mubr.bf16.mxu0 0
        %1668 = vmatmul.mubr.bf16.gmra.mrb[0].mxu0 %v1629
        %v1669 = vpop.f32.mrb[0].mxu0
        %v1670 = vadd.f32 0.0, %v1669
        %v1671 = vpop.f32.mrb[0].mxu0
        %v1672 = vpop.f32.mrb[0].mxu0
        %v1673 = vpop.f32.mrb[0].mxu0
        %1674 = vdwg.mxu0
        %v1676 = vsel %vm1386, %v1616, 0
        %v1679 = vsel %vm1631, %v1625, 0
        %1681 = vmatprep.subr.bf16.mxu0 0
        %1682 = vmatpush1.bf16.msra.mxu0 %v1679
        %1683 = vmatprep.subr.bf16.mxu0 0
        %1684 = vmatpush1.bf16.msra.mxu0 0
        %1685 = vmatprep.subr.bf16.mxu0 0
        %1686 = vmatpush1.bf16.msra.mxu0 0
        %1687 = vmatprep.subr.bf16.mxu0 0
        %1688 = vmatpush1.bf16.msra.mxu0 0
        %1689 = vmatprep.subr.bf16.mxu0 0
        %1690 = vmatpush1.bf16.msra.mxu0 0
        %1691 = vmatprep.subr.bf16.mxu0 0
        %1692 = vmatpush1.bf16.msra.mxu0 0
        %1693 = vmatprep.subr.bf16.mxu0 0
        %1694 = vmatpush1.bf16.msra.mxu0 0
        %1695 = vmatprep.subr.bf16.mxu0 0
        %1696 = vmatpush1.bf16.msra.mxu0 0
        %1697 = vmatprep.subr.bf16.mxu0 0
        %1698 = vmatpush1.bf16.msra.mxu0 0
        %1699 = vmatprep.subr.bf16.mxu0 0
        %1700 = vmatpush1.bf16.msra.mxu0 0
        %1701 = vmatprep.subr.bf16.mxu0 0
        %1702 = vmatpush1.bf16.msra.mxu0 0
        %1703 = vmatprep.subr.bf16.mxu0 0
        %1704 = vmatpush1.bf16.msra.mxu0 0
        %1705 = vmatprep.subr.bf16.mxu0 0
        %1706 = vmatpush1.bf16.msra.mxu0 0
        %1707 = vmatprep.subr.bf16.mxu0 0
        %1708 = vmatpush1.bf16.msra.mxu0 0
        %1709 = vmatprep.subr.bf16.mxu0 0
        %1710 = vmatpush1.bf16.msra.mxu0 0
        %1711 = vmatprep.subr.bf16.mxu0 0
        %1712 = vmatpush1.bf16.msra.mxu0 0
        %1713 = vmatprep.mubr.bf16.mxu0 0
        %1714 = vmatmul.mubr.bf16.gmra.mrb[0].mxu0 %v1676
        %v1715 = vpop.f32.mrb[0].mxu0
        %v1716 = vadd.f32 0.0, %v1715
        %v1717 = vpop.f32.mrb[0].mxu0
        %v1718 = vpop.f32.mrb[0].mxu0
        %v1719 = vpop.f32.mrb[0].mxu0
        %1720 = vdwg.mxu0
        %v1722 = vsel %vm1386, %v1617, 0
        %v1725 = vsel %vm1631, %v1626, 0
        %1727 = vmatprep.subr.bf16.mxu0 0
        %1728 = vmatpush1.bf16.msra.mxu0 %v1725
        %1729 = vmatprep.subr.bf16.mxu0 0
        %1730 = vmatpush1.bf16.msra.mxu0 0
        %1731 = vmatprep.subr.bf16.mxu0 0
        %1732 = vmatpush1.bf16.msra.mxu0 0
        %1733 = vmatprep.subr.bf16.mxu0 0
        %1734 = vmatpush1.bf16.msra.mxu0 0
        %1735 = vmatprep.subr.bf16.mxu0 0
        %1736 = vmatpush1.bf16.msra.mxu0 0
        %1737 = vmatprep.subr.bf16.mxu0 0
        %1738 = vmatpush1.bf16.msra.mxu0 0
        %1739 = vmatprep.subr.bf16.mxu0 0
        %1740 = vmatpush1.bf16.msra.mxu0 0
        %1741 = vmatprep.subr.bf16.mxu0 0
        %1742 = vmatpush1.bf16.msra.mxu0 0
        %1743 = vmatprep.subr.bf16.mxu0 0
        %1744 = vmatpush1.bf16.msra.mxu0 0
        %1745 = vmatprep.subr.bf16.mxu0 0
        %1746 = vmatpush1.bf16.msra.mxu0 0
        %1747 = vmatprep.subr.bf16.mxu0 0
        %1748 = vmatpush1.bf16.msra.mxu0 0
        %1749 = vmatprep.subr.bf16.mxu0 0
        %1750 = vmatpush1.bf16.msra.mxu0 0
        %1751 = vmatprep.subr.bf16.mxu0 0
        %1752 = vmatpush1.bf16.msra.mxu0 0
        %1753 = vmatprep.subr.bf16.mxu0 0
        %1754 = vmatpush1.bf16.msra.mxu0 0
        %1755 = vmatprep.subr.bf16.mxu0 0
        %1756 = vmatpush1.bf16.msra.mxu0 0
        %1757 = vmatprep.subr.bf16.mxu0 0
        %1758 = vmatpush1.bf16.msra.mxu0 0
        %1759 = vmatprep.mubr.bf16.mxu0 0
        %1760 = vmatmul.mubr.bf16.gmra.mrb[0].mxu0 %v1722
        %v1761 = vpop.f32.mrb[0].mxu0
        %v1762 = vadd.f32 0.0, %v1761
        %v1763 = vpop.f32.mrb[0].mxu0
        %v1764 = vpop.f32.mrb[0].mxu0
        %v1765 = vpop.f32.mrb[0].mxu0
        %1766 = vdwg.mxu0
        %v1768 = vsel %vm1386, %v1618, 0
        %v1771 = vsel %vm1631, %v1627, 0
        %1773 = vmatprep.subr.bf16.mxu0 0
        %1774 = vmatpush1.bf16.msra.mxu0 %v1771
        %1775 = vmatprep.subr.bf16.mxu0 0
        %1776 = vmatpush1.bf16.msra.mxu0 0
        %1777 = vmatprep.subr.bf16.mxu0 0
        %1778 = vmatpush1.bf16.msra.mxu0 0
        %1779 = vmatprep.subr.bf16.mxu0 0
        %1780 = vmatpush1.bf16.msra.mxu0 0
        %1781 = vmatprep.subr.bf16.mxu0 0
        %1782 = vmatpush1.bf16.msra.mxu0 0
        %1783 = vmatprep.subr.bf16.mxu0 0
        %1784 = vmatpush1.bf16.msra.mxu0 0
        %1785 = vmatprep.subr.bf16.mxu0 0
        %1786 = vmatpush1.bf16.msra.mxu0 0
        %1787 = vmatprep.subr.bf16.mxu0 0
        %1788 = vmatpush1.bf16.msra.mxu0 0
        %1789 = vmatprep.subr.bf16.mxu0 0
        %1790 = vmatpush1.bf16.msra.mxu0 0
        %1791 = vmatprep.subr.bf16.mxu0 0
        %1792 = vmatpush1.bf16.msra.mxu0 0
        %1793 = vmatprep.subr.bf16.mxu0 0
        %1794 = vmatpush1.bf16.msra.mxu0 0
        %1795 = vmatprep.subr.bf16.mxu0 0
        %1796 = vmatpush1.bf16.msra.mxu0 0
        %1797 = vmatprep.subr.bf16.mxu0 0
        %1798 = vmatpush1.bf16.msra.mxu0 0
        %1799 = vmatprep.subr.bf16.mxu0 0
        %1800 = vmatpush1.bf16.msra.mxu0 0
        %1801 = vmatprep.subr.bf16.mxu0 0
        %1802 = vmatpush1.bf16.msra.mxu0 0
        %1803 = vmatprep.subr.bf16.mxu0 0
        %1804 = vmatpush1.bf16.msra.mxu0 0
        %1805 = vmatprep.mubr.bf16.mxu0 0
        %1806 = vmatmul.mubr.bf16.gmra.mrb[0].mxu0 %v1768
        %v1807 = vpop.f32.mrb[0].mxu0
        %v1808 = vadd.f32 0.0, %v1807
        %v1809 = vpop.f32.mrb[0].mxu0
        %v1810 = vpop.f32.mrb[0].mxu0
        %v1811 = vpop.f32.mrb[0].mxu0
        %1812 = vdwg.mxu0
        %v1813 = vpack.c.bf16 %v1670, %v1670
        %v1814 = vpack.c.bf16 %v1716, %v1716
        %v1815 = vpack.c.bf16 %v1762, %v1762
        %v1816 = vpack.c.bf16 %v1808, %v1808
        %v1817 = vld [vmem:[#allocation13] sm:$0xf]
        %v1818 = vld [vmem:[#allocation13 + $0x4] sm:$0xf]
        %v1819 = vld [vmem:[#allocation13 + $0x8] sm:$0xf]
        %v1820 = vld [vmem:[#allocation13 + $0xc] sm:$0xf]
        %v1822 = vsel %vm1386, %v1813, 0
        %v1825 = vsel %vm1631, %v1817, 0
        %1827 = vmatprep.subr.bf16.mxu0 0
        %1828 = vmatpush1.bf16.msra.mxu0 %v1825
        %1829 = vmatprep.subr.bf16.mxu0 0
        %1830 = vmatpush1.bf16.msra.mxu0 0
        %1831 = vmatprep.subr.bf16.mxu0 0
        %1832 = vmatpush1.bf16.msra.mxu0 0
        %1833 = vmatprep.subr.bf16.mxu0 0
        %1834 = vmatpush1.bf16.msra.mxu0 0
        %1835 = vmatprep.subr.bf16.mxu0 0
        %1836 = vmatpush1.bf16.msra.mxu0 0
        %1837 = vmatprep.subr.bf16.mxu0 0
        %1838 = vmatpush1.bf16.msra.mxu0 0
        %1839 = vmatprep.subr.bf16.mxu0 0
        %1840 = vmatpush1.bf16.msra.mxu0 0
        %1841 = vmatprep.subr.bf16.mxu0 0
        %1842 = vmatpush1.bf16.msra.mxu0 0
        %1843 = vmatprep.subr.bf16.mxu0 0
        %1844 = vmatpush1.bf16.msra.mxu0 0
        %1845 = vmatprep.subr.bf16.mxu0 0
        %1846 = vmatpush1.bf16.msra.mxu0 0
        %1847 = vmatprep.subr.bf16.mxu0 0
        %1848 = vmatpush1.bf16.msra.mxu0 0
        %1849 = vmatprep.subr.bf16.mxu0 0
        %1850 = vmatpush1.bf16.msra.mxu0 0
        %1851 = vmatprep.subr.bf16.mxu0 0
        %1852 = vmatpush1.bf16.msra.mxu0 0
        %1853 = vmatprep.subr.bf16.mxu0 0
        %1854 = vmatpush1.bf16.msra.mxu0 0
        %1855 = vmatprep.subr.bf16.mxu0 0
        %1856 = vmatpush1.bf16.msra.mxu0 0
        %1857 = vmatprep.subr.bf16.mxu0 0
        %1858 = vmatpush1.bf16.msra.mxu0 0
        %1859 = vmatprep.mubr.bf16.mxu0 0
        %1860 = vmatmul.mubr.bf16.gmra.mrb[0].mxu0 %v1822
        %v1861 = vpop.f32.mrb[0].mxu0
        %v1862 = vadd.f32 0.0, %v1861
        %v1863 = vpop.f32.mrb[0].mxu0
        %v1864 = vpop.f32.mrb[0].mxu0
        %v1865 = vpop.f32.mrb[0].mxu0
        %1866 = vdwg.mxu0
        %v1868 = vsel %vm1386, %v1814, 0
        %v1871 = vsel %vm1631, %v1818, 0
        %1873 = vmatprep.subr.bf16.mxu0 0
        %1874 = vmatpush1.bf16.msra.mxu0 %v1871
        %1875 = vmatprep.subr.bf16.mxu0 0
        %1876 = vmatpush1.bf16.msra.mxu0 0
        %1877 = vmatprep.subr.bf16.mxu0 0
        %1878 = vmatpush1.bf16.msra.mxu0 0
        %1879 = vmatprep.subr.bf16.mxu0 0
        %1880 = vmatpush1.bf16.msra.mxu0 0
        %1881 = vmatprep.subr.bf16.mxu0 0
        %1882 = vmatpush1.bf16.msra.mxu0 0
        %1883 = vmatprep.subr.bf16.mxu0 0
        %1884 = vmatpush1.bf16.msra.mxu0 0
        %1885 = vmatprep.subr.bf16.mxu0 0
        %1886 = vmatpush1.bf16.msra.mxu0 0
        %1887 = vmatprep.subr.bf16.mxu0 0
        %1888 = vmatpush1.bf16.msra.mxu0 0
        %1889 = vmatprep.subr.bf16.mxu0 0
        %1890 = vmatpush1.bf16.msra.mxu0 0
        %1891 = vmatprep.subr.bf16.mxu0 0
        %1892 = vmatpush1.bf16.msra.mxu0 0
        %1893 = vmatprep.subr.bf16.mxu0 0
        %1894 = vmatpush1.bf16.msra.mxu0 0
        %1895 = vmatprep.subr.bf16.mxu0 0
        %1896 = vmatpush1.bf16.msra.mxu0 0
        %1897 = vmatprep.subr.bf16.mxu0 0
        %1898 = vmatpush1.bf16.msra.mxu0 0
        %1899 = vmatprep.subr.bf16.mxu0 0
        %1900 = vmatpush1.bf16.msra.mxu0 0
        %1901 = vmatprep.subr.bf16.mxu0 0
        %1902 = vmatpush1.bf16.msra.mxu0 0
        %1903 = vmatprep.subr.bf16.mxu0 0
        %1904 = vmatpush1.bf16.msra.mxu0 0
        %1905 = vmatprep.mubr.bf16.mxu0 0
        %1906 = vmatmul.mubr.bf16.gmra.mrb[0].mxu0 %v1868
        %v1907 = vpop.f32.mrb[0].mxu0
        %v1908 = vadd.f32 0.0, %v1907
        %v1909 = vpop.f32.mrb[0].mxu0
        %v1910 = vpop.f32.mrb[0].mxu0
        %v1911 = vpop.f32.mrb[0].mxu0
        %1912 = vdwg.mxu0
        %v1914 = vsel %vm1386, %v1815, 0
        %v1917 = vsel %vm1631, %v1819, 0
        %1919 = vmatprep.subr.bf16.mxu0 0
        %1920 = vmatpush1.bf16.msra.mxu0 %v1917
        %1921 = vmatprep.subr.bf16.mxu0 0
        %1922 = vmatpush1.bf16.msra.mxu0 0
        %1923 = vmatprep.subr.bf16.mxu0 0
        %1924 = vmatpush1.bf16.msra.mxu0 0
        %1925 = vmatprep.subr.bf16.mxu0 0
        %1926 = vmatpush1.bf16.msra.mxu0 0
        %1927 = vmatprep.subr.bf16.mxu0 0
        %1928 = vmatpush1.bf16.msra.mxu0 0
        %1929 = vmatprep.subr.bf16.mxu0 0
        %1930 = vmatpush1.bf16.msra.mxu0 0
        %1931 = vmatprep.subr.bf16.mxu0 0
        %1932 = vmatpush1.bf16.msra.mxu0 0
        %1933 = vmatprep.subr.bf16.mxu0 0
        %1934 = vmatpush1.bf16.msra.mxu0 0
        %1935 = vmatprep.subr.bf16.mxu0 0
        %1936 = vmatpush1.bf16.msra.mxu0 0
        %1937 = vmatprep.subr.bf16.mxu0 0
        %1938 = vmatpush1.bf16.msra.mxu0 0
        %1939 = vmatprep.subr.bf16.mxu0 0
        %1940 = vmatpush1.bf16.msra.mxu0 0
        %1941 = vmatprep.subr.bf16.mxu0 0
        %1942 = vmatpush1.bf16.msra.mxu0 0
        %1943 = vmatprep.subr.bf16.mxu0 0
        %1944 = vmatpush1.bf16.msra.mxu0 0
        %1945 = vmatprep.subr.bf16.mxu0 0
        %1946 = vmatpush1.bf16.msra.mxu0 0
        %1947 = vmatprep.subr.bf16.mxu0 0
        %1948 = vmatpush1.bf16.msra.mxu0 0
        %1949 = vmatprep.subr.bf16.mxu0 0
        %1950 = vmatpush1.bf16.msra.mxu0 0
        %1951 = vmatprep.mubr.bf16.mxu0 0
        %1952 = vmatmul.mubr.bf16.gmra.mrb[0].mxu0 %v1914
        %v1953 = vpop.f32.mrb[0].mxu0
        %v1954 = vadd.f32 0.0, %v1953
        %v1955 = vpop.f32.mrb[0].mxu0
        %v1956 = vpop.f32.mrb[0].mxu0
        %v1957 = vpop.f32.mrb[0].mxu0
        %1958 = vdwg.mxu0
        %v1960 = vsel %vm1386, %v1816, 0
        %v1963 = vsel %vm1631, %v1820, 0
        %1965 = vmatprep.subr.bf16.mxu0 0
        %1966 = vmatpush1.bf16.msra.mxu0 %v1963
        %1967 = vmatprep.subr.bf16.mxu0 0
        %1968 = vmatpush1.bf16.msra.mxu0 0
        %1969 = vmatprep.subr.bf16.mxu0 0
        %1970 = vmatpush1.bf16.msra.mxu0 0
        %1971 = vmatprep.subr.bf16.mxu0 0
        %1972 = vmatpush1.bf16.msra.mxu0 0
        %1973 = vmatprep.subr.bf16.mxu0 0
        %1974 = vmatpush1.bf16.msra.mxu0 0
        %1975 = vmatprep.subr.bf16.mxu0 0
        %1976 = vmatpush1.bf16.msra.mxu0 0
        %1977 = vmatprep.subr.bf16.mxu0 0
        %1978 = vmatpush1.bf16.msra.mxu0 0
        %1979 = vmatprep.subr.bf16.mxu0 0
        %1980 = vmatpush1.bf16.msra.mxu0 0
        %1981 = vmatprep.subr.bf16.mxu0 0
        %1982 = vmatpush1.bf16.msra.mxu0 0
        %1983 = vmatprep.subr.bf16.mxu0 0
        %1984 = vmatpush1.bf16.msra.mxu0 0
        %1985 = vmatprep.subr.bf16.mxu0 0
        %1986 = vmatpush1.bf16.msra.mxu0 0
        %1987 = vmatprep.subr.bf16.mxu0 0
        %1988 = vmatpush1.bf16.msra.mxu0 0
        %1989 = vmatprep.subr.bf16.mxu0 0
        %1990 = vmatpush1.bf16.msra.mxu0 0
        %1991 = vmatprep.subr.bf16.mxu0 0
        %1992 = vmatpush1.bf16.msra.mxu0 0
        %1993 = vmatprep.subr.bf16.mxu0 0
        %1994 = vmatpush1.bf16.msra.mxu0 0
        %1995 = vmatprep.subr.bf16.mxu0 0
        %1996 = vmatpush1.bf16.msra.mxu0 0
        %1997 = vmatprep.mubr.bf16.mxu0 0
        %1998 = vmatmul.mubr.bf16.gmra.mrb[0].mxu0 %v1960
        %v1999 = vpop.f32.mrb[0].mxu0
        %v2000 = vadd.f32 0.0, %v1999
        %v2001 = vpop.f32.mrb[0].mxu0
        %v2002 = vpop.f32.mrb[0].mxu0
        %v2003 = vpop.f32.mrb[0].mxu0
        %2004 = vdwg.mxu0
        %v2005 = vsel %vm1188, %v1862, 0.0
        %v2006 = vsel %vm1188, %v1908, 0.0
        %v2007 = vadd.f32 %v2005, %v2006
        %v2008 = vsel %vm1188, %v1954, 0.0
        %v2009 = vadd.f32 %v2007, %v2008
        %v2010 = vsel %vm1188, %v2000, 0.0
        %v2011 = vadd.f32 %v2009, %v2010
        %v2012 = vadd.f32 %v2011, %v1170
        %v2013 = vld [vmem:[#allocation15] sm:$0x1]
        %v2014 = vld [vmem:[#allocation16] sm:$0x1]
        %v2015 = vsel %vm1188, %v2012, 0.0
        %2016 = vadd.xlane.f32.xlu0 %v2015
        %v2017 = vpop.xlane.xlu0 %2016
        %v2018 = vrcp.pop 32.0
        %v2019 = vmul.f32 %v2017, %v2018
        %v2020 = vsub.f32 %v2012, %v2019
        %v2021 = vmul.f32 %v2020, %v2020
        %v2022 = vsel %vm1188, %v2021, 0.0
        %2023 = vadd.xlane.f32.xlu0 %v2022
        %v2024 = vpop.xlane.xlu0 %2023
        %v2025 = vmul.f32 %v2024, %v2018
        %v2026 = vadd.f32 %v2025, 1e-06
        %v2027 = vrsqrt.pop %v2026
        %v2028 = vmul.f32 %v2020, %v2027
        %v2030 = vlaneseq
        %v2031 = vshrl.u32 %v2030, 7
        %v2032 = vsub.s32 0, %v2031
        %v2033 = vrot.slane %v2013, %v2032
        %v2035 = vmul.f32 %v2028, %v2033
        %v2037 = vlaneseq
        %v2038 = vshrl.u32 %v2037, 7
        %v2039 = vsub.s32 0, %v2038
        %v2040 = vrot.slane %v2014, %v2039
        %v2042 = vadd.f32 %v2035, %v2040
        %v2043 = vpack.c.bf16 %v2042, %v2042
        %v2044 = vld [vmem:[#allocation18] sm:$0xf]
        %v2045 = vld [vmem:[#allocation18 + $0x4] sm:$0xf]
        %v2046 = vld [vmem:[#allocation18 + $0x8] sm:$0xf]
        %v2047 = vld [vmem:[#allocation18 + $0xc] sm:$0xf]
        %v2048 = vld [vmem:[#allocation19] sm:$0x1]
        %v2050 = vlaneseq
        %v2051 = vshrl.u32 %v2050, 7
        %v2052 = vsub.s32 0, %v2051
        %v2053 = vrot.slane %v2048, %v2052
        %v2059 = vunpack.c.l.b16 %v2044
        %v2060 = vunpack.c.l.b16 %v2045
        %v2061 = vunpack.c.l.b16 %v2046
        %v2062 = vunpack.c.l.b16 %v2047
        %v2063 = vpack.c.b16 %v2060, %v2059
        %v2064 = vpack.c.b16 %v2062, %v2061
        %v2068 = vsel %vm1188, %v2043, 0
        %2070 = vmatprep.subr.bf16.mxu0 0
        %2071 = vmatpush1.bf16.msra.mxu0 %v2063
        %2072 = vmatprep.subr.bf16.mxu0 0
        %2073 = vmatpush1.bf16.msra.mxu0 %v2064
        %2074 = vmatprep.subr.bf16.mxu0 0
        %2075 = vmatpush1.bf16.msra.mxu0 0
        %2076 = vmatprep.subr.bf16.mxu0 0
        %2077 = vmatpush1.bf16.msra.mxu0 0
        %2078 = vmatprep.subr.bf16.mxu0 0
        %2079 = vmatpush1.bf16.msra.mxu0 0
        %2080 = vmatprep.subr.bf16.mxu0 0
        %2081 = vmatpush1.bf16.msra.mxu0 0
        %2082 = vmatprep.subr.bf16.mxu0 0
        %2083 = vmatpush1.bf16.msra.mxu0 0
        %2084 = vmatprep.subr.bf16.mxu0 0
        %2085 = vmatpush1.bf16.msra.mxu0 0
        %2086 = vmatprep.subr.bf16.mxu0 0
        %2087 = vmatpush1.bf16.msra.mxu0 0
        %2088 = vmatprep.subr.bf16.mxu0 0
        %2089 = vmatpush1.bf16.msra.mxu0 0
        %2090 = vmatprep.subr.bf16.mxu0 0
        %2091 = vmatpush1.bf16.msra.mxu0 0
        %2092 = vmatprep.subr.bf16.mxu0 0
        %2093 = vmatpush1.bf16.msra.mxu0 0
        %2094 = vmatprep.subr.bf16.mxu0 0
        %2095 = vmatpush1.bf16.msra.mxu0 0
        %2096 = vmatprep.subr.bf16.mxu0 0
        %2097 = vmatpush1.bf16.msra.mxu0 0
        %2098 = vmatprep.subr.bf16.mxu0 0
        %2099 = vmatpush1.bf16.msra.mxu0 0
        %2100 = vmatprep.subr.bf16.mxu0 0
        %2101 = vmatpush1.bf16.msra.mxu0 0
        %2102 = vmatprep.mubr.bf16.mxu0 0
        %2103 = vmatmul.mubr.bf16.gmra.mrb[0].mxu0 %v2068
        %v2104 = vpop.f32.mrb[0].mxu0
        %v2105 = vadd.f32 %v2053, %v2104
        %v2106 = vpop.f32.mrb[0].mxu0
        %v2107 = vpop.f32.mrb[0].mxu0
        %v2108 = vpop.f32.mrb[0].mxu0
        %2109 = vdwg.mxu0
        %v2110 = vmax.f32 %v2105, 0.0
        %v2111 = vpack.c.bf16 %v2110, %v2110
        %v2112 = vld [vmem:[#allocation21] sm:$0xf]
        %v2113 = vld [vmem:[#allocation21 + $0x4] sm:$0xf]
        %v2114 = vld [vmem:[#allocation21 + $0x8] sm:$0xf]
        %v2115 = vld [vmem:[#allocation21 + $0xc] sm:$0xf]
        %v2116 = vld [vmem:[#allocation21 + $0x10] sm:$0xf]
        %v2117 = vld [vmem:[#allocation21 + $0x14] sm:$0xf]
        %v2118 = vld [vmem:[#allocation21 + $0x18] sm:$0xf]
        %v2119 = vld [vmem:[#allocation21 + $0x1c] sm:$0xf]
        %v2120 = vld [vmem:[#allocation22] sm:$0x1]
        %v2122 = vlaneseq
        %v2123 = vshrl.u32 %v2122, 7
        %v2124 = vsub.s32 0, %v2123
        %v2125 = vrot.slane %v2120, %v2124
        %v2135 = vunpack.c.l.b16 %v2112
        %v2136 = vunpack.c.l.b16 %v2113
        %v2137 = vunpack.c.l.b16 %v2114
        %v2138 = vunpack.c.l.b16 %v2115
        %v2139 = vunpack.c.l.b16 %v2116
        %v2140 = vunpack.c.l.b16 %v2117
        %v2141 = vunpack.c.l.b16 %v2118
        %v2142 = vunpack.c.l.b16 %v2119
        %v2143 = vpack.c.b16 %v2136, %v2135
        %v2144 = vpack.c.b16 %v2138, %v2137
        %v2145 = vpack.c.b16 %v2140, %v2139
        %v2146 = vpack.c.b16 %v2142, %v2141
        %vm2151 = vcmask 523264
        %v2153 = vsel %vm2151, %v2111, 0
        %2155 = vmatprep.subr.bf16.mxu0 0
        %2156 = vmatpush1.bf16.msra.mxu0 %v2143
        %2157 = vmatprep.subr.bf16.mxu0 0
        %2158 = vmatpush1.bf16.msra.mxu0 %v2144
        %2159 = vmatprep.subr.bf16.mxu0 0
        %2160 = vmatpush1.bf16.msra.mxu0 %v2145
        %2161 = vmatprep.subr.bf16.mxu0 0
        %2162 = vmatpush1.bf16.msra.mxu0 %v2146
        %2163 = vmatprep.subr.bf16.mxu0 0
        %2164 = vmatpush1.bf16.msra.mxu0 0
        %2165 = vmatprep.subr.bf16.mxu0 0
        %2166 = vmatpush1.bf16.msra.mxu0 0
        %2167 = vmatprep.subr.bf16.mxu0 0
        %2168 = vmatpush1.bf16.msra.mxu0 0
        %2169 = vmatprep.subr.bf16.mxu0 0
        %2170 = vmatpush1.bf16.msra.mxu0 0
        %2171 = vmatprep.subr.bf16.mxu0 0
        %2172 = vmatpush1.bf16.msra.mxu0 0
        %2173 = vmatprep.subr.bf16.mxu0 0
        %2174 = vmatpush1.bf16.msra.mxu0 0
        %2175 = vmatprep.subr.bf16.mxu0 0
        %2176 = vmatpush1.bf16.msra.mxu0 0
        %2177 = vmatprep.subr.bf16.mxu0 0
        %2178 = vmatpush1.bf16.msra.mxu0 0
        %2179 = vmatprep.subr.bf16.mxu0 0
        %2180 = vmatpush1.bf16.msra.mxu0 0
        %2181 = vmatprep.subr.bf16.mxu0 0
        %2182 = vmatpush1.bf16.msra.mxu0 0
        %2183 = vmatprep.subr.bf16.mxu0 0
        %2184 = vmatpush1.bf16.msra.mxu0 0
        %2185 = vmatprep.subr.bf16.mxu0 0
        %2186 = vmatpush1.bf16.msra.mxu0 0
        %2187 = vmatprep.mubr.bf16.mxu0 0
        %2188 = vmatmul.mubr.bf16.gmra.mrb[0].mxu0 %v2153
        %v2189 = vpop.f32.mrb[0].mxu0
        %v2190 = vadd.f32 %v2125, %v2189
        %v2191 = vpop.f32.mrb[0].mxu0
        %v2192 = vpop.f32.mrb[0].mxu0
        %v2193 = vpop.f32.mrb[0].mxu0
        %2194 = vdwg.mxu0
        %v2195 = vadd.f32 %v2190, %v2042
        %v2196 = vld [vmem:[#allocation24] sm:$0x1]
        %v2197 = vld [vmem:[#allocation25] sm:$0x1]
        %v2198 = vsel %vm1188, %v2195, 0.0
        %2199 = vadd.xlane.f32.xlu0 %v2198
        %v2200 = vpop.xlane.xlu0 %2199
        %v2201 = vmul.f32 %v2200, %v2018
        %v2202 = vsub.f32 %v2195, %v2201
        %v2203 = vmul.f32 %v2202, %v2202
        %v2204 = vsel %vm1188, %v2203, 0.0
        %2205 = vadd.xlane.f32.xlu0 %v2204
        %v2206 = vpop.xlane.xlu0 %2205
        %v2207 = vmul.f32 %v2206, %v2018
        %v2208 = vadd.f32 %v2207, 1e-06
        %v2209 = vrsqrt.pop %v2208
        %v2210 = vmul.f32 %v2202, %v2209
        %v2212 = vlaneseq
        %v2213 = vshrl.u32 %v2212, 7
        %v2214 = vsub.s32 0, %v2213
        %v2215 = vrot.slane %v2196, %v2214
        %v2217 = vmul.f32 %v2210, %v2215
        %v2219 = vlaneseq
        %v2220 = vshrl.u32 %v2219, 7
        %v2221 = vsub.s32 0, %v2220
        %v2222 = vrot.slane %v2197, %v2221
        %v2224 = vadd.f32 %v2217, %v2222
        %2225 = vst.msk [vmem:[%s731] sm:$0xff] %vm1188, %v2224
        %s2226 = sand.u32 %s373, 1
        %s2227 = scalar_lea.sflag [#allocation6], %s2226
        %s2228 = sand.u32 %s373, 1
        %s2229 = smul.addr %s2228, 8
        %s2230 = scalar_lea.vmem [#allocation27], %s2229
        %s2231 = sand.u32 %s401, 1
        %s2232 = scalar_lea.sflag [#allocation29], %s2231
        %s2233 = sand.u32 %s401, 1
        %s2234 = smul.addr %s2233, 16
        %s2235 = scalar_lea.vmem [#allocation28], %s2234
        // Predicated region
        $region137: #{tpu_custom_call.1} parent=75 // pred_check
          %p2236 = pneg %p383
        $region138: #{tpu_custom_call.1} parent=75 // pred_check_branch
          %2238 = sbr.rel (%p2236) target = $region140
        $region139: #{tpu_custom_call.1} parent=75 // pred_region
          %s2240 = ssub.s32 128, 128
          %2241 = vsyncadd %s2227, %s2240
          %s2242 = sadd.s32 %s50, %s49
          %s2243 = smul.addr %s2242, 128
          %s2244 = scalar_lea.hbm %s14, %s2243
          %s2246 = sshll.u32 %s2230, 4
          %s2247 = int_to_ptr.vmem [resolvable:$true] %s2246
          %2249 = dma.vmem_to_hbm [thread:$0]  %s2247, 128, %s2244, %s2227
        $region140: #{tpu_custom_call.1} parent=75 // pred_fallthru
          _
        // Predicated region
        $region141: #{tpu_custom_call.1} parent=75 // pred_check
          %p2250 = pneg %p411
        $region142: #{tpu_custom_call.1} parent=75 // pred_check_branch
          %2252 = sbr.rel (%p2250) target = $region144
        $region143: #{tpu_custom_call.1} parent=75 // pred_region
          %s2254 = ssub.s32 256, 256
          %2255 = vsyncadd %s2232, %s2254
          %s2256 = smul.addr %s49, 4
          %s2257 = sadd.s32 %s50, %s2256
          %s2258 = smul.addr %s2257, 64
          %s2259 = scalar_lea.hbm %s15, %s2258
          %s2260 = sshll.u32 %s2235, 4
          %s2261 = int_to_ptr.vmem [resolvable:$true] %s2260
          %2266 = dma.vmem_to_hbm [thread:$0]  %s2261, 256, %s2259, %s2232, 64, 64, 4
        $region144: #{tpu_custom_call.1} parent=75 // pred_fallthru
          _
      $region76: #{tpu_custom_call.1} parent=5 // pred_fallthru
        _
      %p2267 = scmp.le.s32.totalorder 2, %s40
      // Predicated region
      $region145: #{tpu_custom_call.1} parent=5 // pred_check
        %p2268 = pneg %p2267
      $region146: #{tpu_custom_call.1} parent=5 // pred_check_branch
        %2270 = sbr.rel (%p2268) target = $region148
      $region147: #{tpu_custom_call.1} parent=5 // pred_region
        %s2271 = ssub.s32 %s40, 2
        // Predicated region
        $region149: #{tpu_custom_call.1} parent=147 // pred_check
          %p2272 = pneg %p389
        $region150: #{tpu_custom_call.1} parent=147 // pred_check_branch
          %2274 = sbr.rel (%p2272) target = $region152
        $region151: #{tpu_custom_call.1} parent=147 // pred_region
          %s2275 = sand.u32 %s374, 1
          %s2276 = scalar_lea.sflag [#allocation6], %s2275
          %s2277 = sand.u32 %s374, 1
          %s2278 = smul.addr %s2277, 8
          %s2279 = scalar_lea.vmem [#allocation27], %s2278
          %2280 = dma.done %s2276, 128
        $region152: #{tpu_custom_call.1} parent=147 // pred_fallthru
          _
        // Predicated region
        $region153: #{tpu_custom_call.1} parent=147 // pred_check
          %p2281 = pneg %p417
        $region154: #{tpu_custom_call.1} parent=147 // pred_check_branch
          %2283 = sbr.rel (%p2281) target = $region156
        $region155: #{tpu_custom_call.1} parent=147 // pred_region
          %s2284 = sand.u32 %s402, 1
          %s2285 = scalar_lea.sflag [#allocation29], %s2284
          %s2286 = sand.u32 %s402, 1
          %s2287 = smul.addr %s2286, 16
          %s2288 = scalar_lea.vmem [#allocation28], %s2287
          %2289 = dma.done %s2285, 256
        $region156: #{tpu_custom_call.1} parent=147 // pred_fallthru
          _
      $region148: #{tpu_custom_call.1} parent=5 // pred_fallthru
        _
    $region6: #{tpu_custom_call.1} parent=1 // loop_footer
      %s44 = sadd.s32 1, %s40
    $region7: #{tpu_custom_call.1} parent=1 // loop_footer_branch
      %39 = sbr.rel target = $region3
    $region8: #{tpu_custom_call.1} parent=1 // loop_exit
      _
    %2290 = vsyncpa [#allocation5], 1
    %s2291 = scalar_lea.sflag [#allocation5], 1
    %2292 = vsyncpa %s2291, 1
    %2293 = vsyncpa [#allocation8], 1
    %s2294 = scalar_lea.sflag [#allocation8], 1
    %2295 = vsyncpa %s2294, 1
    %2296 = vsyncpa [#allocation11], 1
    %2297 = vsyncpa [#allocation14], 1
    %2298 = vsyncpa [#allocation17], 1
    %2299 = vsyncpa [#allocation20], 1
    %2300 = vsyncpa [#allocation23], 1
    %2301 = vsyncpa [#allocation26], 1
    %2302 = vsyncpa [#allocation6], 1
    %s2303 = scalar_lea.sflag [#allocation6], 1
    %2304 = vsyncpa %s2303, 1
    %2305 = vsyncpa [#allocation29], 1
    %s2306 = scalar_lea.sflag [#allocation29], 1
    %2307 = vsyncpa %s2306, 1

</llo_original>
